<compile_context>
chip_gen: v6e
topology: v6e:2x2x1
jax: 0.10.0
libtpu: 0.0.40
codegen_flags: <defaults>
</compile_context>

<pallas_src>
import functools

import jax
import jax.numpy as jnp
from jax import lax
from jax.experimental import pallas as pl
from jax.experimental.pallas import tpu as pltpu


TEMPERATURE = 0.5
INV_T = 1.0 / TEMPERATURE
BN_EPS = 1e-5
NORM_EPS = 1e-12          # F.normalize default eps
DENOM_FLOOR = 1e-30       # guard before log for degenerate tiny batches


def _round_up(n, m):
    return ((n + m - 1) // m) * m


def _pick_tile(n, pref=256):
    """Row/col tile for the similarity grid: 256-aligned for the v6e/v7x
    2x256^2 MXU (128 also fine on v5e); small problems use one full block."""
    if n <= pref:
        return n
    for t in (pref, 128, 64, 32, 16, 8):
        if n % t == 0:
            return t
    return n


# ----------------- Kernel 1: stacked backbone-stub + projector ------------- #
def fwd_kernel(x_ref, mask_ref, wf_ref, bf_ref, w1_ref, b1_ref,
               gamma_ref, beta_ref, w2_ref, b2_ref,
               outq_ref, outt_ref, pos_ref, *, n_valid_per_view):
    n2 = x_ref.shape[0]                 # 2 * B_pad (both views stacked)
    b_pad = n2 // 2
    inv_b = 1.0 / n_valid_per_view      # BN mean/var over the real rows only

    # Backbone stand-in: Linear(C*H*W, feat_dim), once for both views.
    feat = jnp.dot(x_ref[...], wf_ref[...],
                   preferred_element_type=jnp.float32) + bf_ref[...]

    # prediction_MLP layer1: Linear -> BatchNorm1d (per-view stats) -> ReLU.
    h = jnp.dot(feat.astype(jnp.bfloat16), w1_ref[...],
                preferred_element_type=jnp.float32) + b1_ref[...]
    hv = h.reshape(2, b_pad, h.shape[-1])          # free view (b_pad % 8 == 0)
    m3 = mask_ref[...]                             # (2, b_pad, 1) row-valid mask
    mean = jnp.sum(hv * m3, axis=1, keepdims=True) * inv_b
    d = (hv - mean) * m3
    var = jnp.sum(d * d, axis=1, keepdims=True) * inv_b
    hv = (hv - mean) * lax.rsqrt(var + BN_EPS) * gamma_ref[...] + beta_ref[...]
    h = jnp.maximum(hv, 0.0).reshape(n2, -1)

    # prediction_MLP layer2: Linear.
    o = jnp.dot(h.astype(jnp.bfloat16), w2_ref[...],
                preferred_element_type=jnp.float32) + b2_ref[...]

    # F.normalize(dim=-1) via rsqrt (EUP slot, no divide).
    ssq = jnp.sum(o * o, axis=-1, keepdims=True)
    out = o * lax.rsqrt(jnp.maximum(ssq, NORM_EPS * NORM_EPS))   # (n2, P) f32

    # Hoisted single bf16 cast; write queries and the transposed keys once.
    out_bf = out.astype(jnp.bfloat16)
    outq_ref[...] = out_bf
    outt_ref[...] = out_bf.T                                      # (P, n2)

    # Per-row positive logit out1_i . out2_i from the (2, B_pad, P) view.
    ov = out.reshape(2, b_pad, out.shape[-1])
    pos_ref[...] = jnp.sum(ov[0] * ov[1], axis=-1, keepdims=True)  # (b_pad, 1)


# -------- Kernel 2: NT-Xent with streamed key blocks (online row-sum) ------ #
def ntxent_kernel(q_ref, kt_ref, kmask_ref, pos_ref, row_loss_ref, denom_acc,
                  *, tq, tk):
    qi = pl.program_id(0)
    ki = pl.program_id(1)

    @pl.when(ki == 0)
    def _():
        denom_acc[...] = jnp.zeros_like(denom_acc)

    # Plain (M,K)@(K,N) dot: key operand was transposed once in fwd_kernel.
    logits = jnp.dot(q_ref[...], kt_ref[...],
                     preferred_element_type=jnp.float32)          # (tq, tk) f32
    e = jnp.exp(logits * INV_T)                                   # f32 (v5e-safe)

    # Exact diagonal exclusion + padded-key-column exclusion.
    row_ids = qi * tq + lax.broadcasted_iota(jnp.int32, (tq, tk), 0)
    col_ids = ki * tk + lax.broadcasted_iota(jnp.int32, (tq, tk), 1)
    contrib = jnp.where(row_ids != col_ids, e * kmask_ref[...], 0.0)
    denom_acc[...] += jnp.sum(contrib, axis=-1, keepdims=True)

    @pl.when(ki == pl.num_programs(1) - 1)
    def _():
        denom = jnp.maximum(denom_acc[...], DENOM_FLOOR)
        # row_loss_i = -log(exp(pos_i/T)/denom_i) = log(denom_i) - pos_i/T
        row_loss_ref[...] = jnp.log(denom) - pos_ref[...] * INV_T


# --------------------------------- wrapper --------------------------------- #
def simclr_loss(pos1, pos2, params):
    assert pos1.shape == pos2.shape
    b = pos1.shape[0]
    b_pad = _round_up(b, 8)            # f32 sublane; stacked 2*b_pad is 16-aligned
    n2 = 2 * b_pad
    p_dim = params["w2"].shape[1]

    # bf16 cast BEFORE padding/stacking (no f32 round-trip of the input slab).
    x1 = pos1.reshape(b, -1).astype(jnp.bfloat16)
    x2 = pos2.reshape(b, -1).astype(jnp.bfloat16)
    pad = ((0, b_pad - b), (0, 0))
    x = jnp.concatenate([jnp.pad(x1, pad), jnp.pad(x2, pad)], axis=0)

    row_valid = (jnp.arange(b_pad) < b).astype(jnp.float32)        # (b_pad,)
    mask3 = jnp.broadcast_to(row_valid[None, :, None], (2, b_pad, 1))

    wf = params["wf"].astype(jnp.bfloat16)
    w1 = params["w1"].astype(jnp.bfloat16)
    w2 = params["w2"].astype(jnp.bfloat16)

    vmem_specs = pl.BlockSpec(memory_space=pltpu.MemorySpace.VMEM)
    out_q, out_t, pos_half = pl.pallas_call(
        functools.partial(fwd_kernel, n_valid_per_view=b),
        out_shape=(jax.ShapeDtypeStruct((n2, p_dim), jnp.bfloat16),   # queries
                   jax.ShapeDtypeStruct((p_dim, n2), jnp.bfloat16),   # keys^T
                   jax.ShapeDtypeStruct((b_pad, 1), jnp.float32)),    # pos logit
        in_specs=[vmem_specs] * 10,
        out_specs=(vmem_specs, vmem_specs, vmem_specs),
        compiler_params=pltpu.CompilerParams(
            # Budget derived against v7x's 64 MiB physical VMEM with headroom.
            vmem_limit_bytes=48 * 1024 * 1024),
    )(x, mask3, wf, params["bf"], w1, params["b1"],
      params["gamma"], params["beta"], w2, params["b2"])

    pos_full = jnp.concatenate([pos_half, pos_half], axis=0)       # (n2, 1)
    kmask = jnp.concatenate([row_valid, row_valid])[None, :]       # (1, n2)

    tq = _pick_tile(n2)
    tk = _pick_tile(n2)
    nq, nk = n2 // tq, n2 // tk

    row_loss = pl.pallas_call(
        functools.partial(ntxent_kernel, tq=tq, tk=tk),
        out_shape=jax.ShapeDtypeStruct((n2, 1), jnp.float32),
        grid_spec=pltpu.PrefetchScalarGridSpec(
            num_scalar_prefetch=0,
            grid=(nq, nk),
            in_specs=[pl.BlockSpec((tq, p_dim), lambda i, k: (i, 0)),
                      pl.BlockSpec((p_dim, tk), lambda i, k: (0, k)),
                      pl.BlockSpec((1, tk), lambda i, k: (0, k)),
                      pl.BlockSpec((tq, 1), lambda i, k: (i, 0))],
            out_specs=pl.BlockSpec((tq, 1), lambda i, k: (i, 0)),
            scratch_shapes=[pltpu.VMEM((tq, 1), jnp.float32)]),
        compiler_params=pltpu.CompilerParams(
            dimension_semantics=("parallel", "arbitrary"),
            vmem_limit_bytes=48 * 1024 * 1024),
    )(out_q, out_t, kmask, pos_full)

    # Final masked mean over the 2B real rows (tiny cross-block reduction).
    qmask = jnp.concatenate([row_valid, row_valid])                # (n2,)
    return jnp.sum(row_loss[:, 0] * qmask) / (2.0 * b)


# ----------------------- pure-JAX reference (check) ------------------------ #
def simclr_loss_ref(pos1, pos2, params):
    """Faithful PyTorch-style NT-Xent (eye mask, exp(pos)/denom) with the same
    bf16-at-MXU-inputs numerics as the kernel."""
    t, bn_eps, norm_eps = TEMPERATURE, BN_EPS, NORM_EPS
    b = pos1.shape[0]

    def forward_one(x):
        x = x.reshape(b, -1).astype(jnp.bfloat16)
        f = jnp.dot(x, params["wf"].astype(jnp.bfloat16),
                    preferred_element_type=jnp.float32) + params["bf"]
        h = jnp.dot(f.astype(jnp.bfloat16), params["w1"].astype(jnp.bfloat16),
                    preferred_element_type=jnp.float32) + params["b1"]
        mean = h.mean(0, keepdims=True)
        var = ((h - mean) ** 2).mean(0, keepdims=True)
        h = (h - mean) / jnp.sqrt(var + bn_eps) * params["gamma"] + params["beta"]
        h = jnp.maximum(h, 0.0)
        o = jnp.dot(h.astype(jnp.bfloat16), params["w2"].astype(jnp.bfloat16),
                    preferred_element_type=jnp.float32) + params["b2"]
        n = jnp.sqrt(jnp.sum(o * o, axis=-1, keepdims=True))
        return o / jnp.maximum(n, norm_eps)

    o1, o2 = forward_one(pos1), forward_one(pos2)
    out = jnp.concatenate([o1, o2], axis=0)
    sim = jnp.exp(
        jnp.dot(out.astype(jnp.bfloat16), out.astype(jnp.bfloat16).T,
                preferred_element_type=jnp.float32) / t)
    mask = 1.0 - jnp.eye(2 * b, dtype=jnp.float32)
    denom = (sim * mask).sum(-1)
    pos = jnp.exp(jnp.sum(o1 * o2, -1) / t)
    pos = jnp.concatenate([pos, pos], 0)
    return jnp.mean(-jnp.log(pos / denom))


# --------------------------------- main ------------------------------------ #
if __name__ == "__main__":
    # Small shapes consistent with the module: batch=2, C=4, 16x16 images.
    B, C, H, W = 2, 4, 16, 16
    D_IN = C * H * W          # flattened backbone input
    FEAT_DIM = 128            # backbone output dim (feat_dim)
    HID = 512                 # prediction_MLP hidden_dim
    OUT = 512                 # prediction_MLP out_dim

    key = jax.random.PRNGKey(0)
    k_p1, k_p2, k_wf, k_bf, k_w1, k_b1, k_w2, k_b2 = jax.random.split(key, 8)

    pos1 = jax.random.normal(k_p1, (B, C, H, W), dtype=jnp.float32)
    pos2 = jax.random.normal(k_p2, (B, C, H, W), dtype=jnp.float32)

    params = {
        # backbone stand-in
        "wf": jax.random.normal(k_wf, (D_IN, FEAT_DIM), jnp.float32) * 0.02,
        "bf": jax.random.normal(k_bf, (1, FEAT_DIM), jnp.float32) * 0.01,
        # prediction_MLP layer1: Linear + BatchNorm1d (+ ReLU)
        "w1": jax.random.normal(k_w1, (FEAT_DIM, HID), jnp.float32) * 0.02,
        "b1": jax.random.normal(k_b1, (1, HID), jnp.float32) * 0.01,
        "gamma": jnp.ones((1, HID), jnp.float32),
        "beta": jnp.zeros((1, HID), jnp.float32),
        # prediction_MLP layer2: Linear
        "w2": jax.random.normal(k_w2, (HID, OUT), jnp.float32) * 0.02,
        "b2": jax.random.normal(k_b2, (1, OUT), jnp.float32) * 0.01,
    }

    loss = jax.jit(simclr_loss)(pos1, pos2, params)
    loss = jax.block_until_ready(loss)

    ref = simclr_loss_ref(pos1, pos2, params)
    assert jnp.isfinite(loss), "non-finite loss"
    assert jnp.allclose(loss, ref, rtol=1e-2, atol=1e-2), (loss, ref)

    print("KERNEL_OK")
</pallas_src>

<mosaic_0001>
module attributes {stable_mosaic.version = 11 : i64} {
  func.func @fwd_kernel(%arg0: memref<16x1024xbf16, #tpu.memory_space<vmem>>, %arg1: memref<2x8x1xf32, #tpu.memory_space<vmem>>, %arg2: memref<1024x128xbf16, #tpu.memory_space<vmem>>, %arg3: memref<1x128xf32, #tpu.memory_space<vmem>>, %arg4: memref<128x512xbf16, #tpu.memory_space<vmem>>, %arg5: memref<1x512xf32, #tpu.memory_space<vmem>>, %arg6: memref<1x512xf32, #tpu.memory_space<vmem>>, %arg7: memref<1x512xf32, #tpu.memory_space<vmem>>, %arg8: memref<512x512xbf16, #tpu.memory_space<vmem>>, %arg9: memref<1x512xf32, #tpu.memory_space<vmem>>, %arg10: memref<16x512xbf16, #tpu.memory_space<vmem>>, %arg11: memref<512x16xbf16, #tpu.memory_space<vmem>>, %arg12: memref<8x1xf32, #tpu.memory_space<vmem>>) attributes {dimension_semantics = [], scalar_prefetch = 0 : i64, scratch_operands = 0 : i64, tpu.core_type = #tpu.core_type<tc>} {
    %c0 = arith.constant 0 : index
    %c0_0 = arith.constant 0 : index
    %0 = vector.load %arg0[%c0, %c0_0] : memref<16x1024xbf16, #tpu.memory_space<vmem>>, vector<16x1024xbf16>
    %c0_1 = arith.constant 0 : index
    %c0_2 = arith.constant 0 : index
    %1 = vector.load %arg2[%c0_1, %c0_2] : memref<1024x128xbf16, #tpu.memory_space<vmem>>, vector<1024x128xbf16>
    %cst = arith.constant dense<0.000000e+00> : vector<16x128xf32>
    %2 = tpu.matmul %0, %1, %cst {dimension_numbers = #tpu.dot_dimension_numbers<[1], [0], [0], [1], [0, 0, 1, 1], [], []>} : vector<16x1024xbf16>, vector<1024x128xbf16>, vector<16x128xf32> -> vector<16x128xf32>
    %c0_3 = arith.constant 0 : index
    %c0_4 = arith.constant 0 : index
    %3 = vector.load %arg3[%c0_3, %c0_4] : memref<1x128xf32, #tpu.memory_space<vmem>>, vector<1x128xf32>
    %4 = vector.broadcast %3 : vector<1x128xf32> to vector<16x128xf32>
    %5 = arith.addf %2, %4 : vector<16x128xf32>
    %6 = arith.truncf %5 : vector<16x128xf32> to vector<16x128xbf16>
    %c0_5 = arith.constant 0 : index
    %c0_6 = arith.constant 0 : index
    %7 = vector.load %arg4[%c0_5, %c0_6] : memref<128x512xbf16, #tpu.memory_space<vmem>>, vector<128x512xbf16>
    %cst_7 = arith.constant dense<0.000000e+00> : vector<16x512xf32>
    %8 = tpu.matmul %6, %7, %cst_7 {dimension_numbers = #tpu.dot_dimension_numbers<[1], [0], [0], [1], [0, 0, 1, 1], [], []>} : vector<16x128xbf16>, vector<128x512xbf16>, vector<16x512xf32> -> vector<16x512xf32>
    %c0_8 = arith.constant 0 : index
    %c0_9 = arith.constant 0 : index
    %9 = vector.load %arg5[%c0_8, %c0_9] : memref<1x512xf32, #tpu.memory_space<vmem>>, vector<1x512xf32>
    %10 = vector.broadcast %9 : vector<1x512xf32> to vector<16x512xf32>
    %11 = arith.addf %8, %10 : vector<16x512xf32>
    %12 = vector.shape_cast %11 : vector<16x512xf32> to vector<2x8x512xf32>
    %c0_10 = arith.constant 0 : index
    %c0_11 = arith.constant 0 : index
    %c0_12 = arith.constant 0 : index
    %13 = vector.load %arg1[%c0_10, %c0_11, %c0_12] : memref<2x8x1xf32, #tpu.memory_space<vmem>>, vector<2x8x1xf32>
    %14 = vector.broadcast %13 : vector<2x8x1xf32> to vector<2x8x512xf32>
    %15 = arith.mulf %12, %14 : vector<2x8x512xf32>
    %cst_13 = arith.constant dense<0.000000e+00> : vector<2x512xf32>
    %16 = vector.multi_reduction <add>, %15, %cst_13 [1] : vector<2x8x512xf32> to vector<2x512xf32>
    %17 = vector.shape_cast %16 : vector<2x512xf32> to vector<2x1x512xf32>
    %cst_14 = arith.constant 5.000000e-01 : f32
    %18 = vector.broadcast %cst_14 : f32 to vector<2x1x512xf32>
    %19 = arith.mulf %17, %18 : vector<2x1x512xf32>
    %20 = vector.broadcast %19 : vector<2x1x512xf32> to vector<2x8x512xf32>
    %21 = arith.subf %12, %20 : vector<2x8x512xf32>
    %22 = vector.broadcast %13 : vector<2x8x1xf32> to vector<2x8x512xf32>
    %23 = arith.mulf %21, %22 : vector<2x8x512xf32>
    %24 = arith.mulf %23, %23 : vector<2x8x512xf32>
    %cst_15 = arith.constant dense<0.000000e+00> : vector<2x512xf32>
    %25 = vector.multi_reduction <add>, %24, %cst_15 [1] : vector<2x8x512xf32> to vector<2x512xf32>
    %26 = vector.shape_cast %25 : vector<2x512xf32> to vector<2x1x512xf32>
    %cst_16 = arith.constant 5.000000e-01 : f32
    %27 = vector.broadcast %cst_16 : f32 to vector<2x1x512xf32>
    %28 = arith.mulf %26, %27 : vector<2x1x512xf32>
    %29 = vector.broadcast %19 : vector<2x1x512xf32> to vector<2x8x512xf32>
    %30 = arith.subf %12, %29 : vector<2x8x512xf32>
    %cst_17 = arith.constant 9.99999974E-6 : f32
    %31 = vector.broadcast %cst_17 : f32 to vector<2x1x512xf32>
    %32 = arith.addf %28, %31 : vector<2x1x512xf32>
    %33 = math.rsqrt %32 : vector<2x1x512xf32>
    %34 = vector.broadcast %33 : vector<2x1x512xf32> to vector<2x8x512xf32>
    %35 = arith.mulf %30, %34 : vector<2x8x512xf32>
    %c0_18 = arith.constant 0 : index
    %c0_19 = arith.constant 0 : index
    %36 = vector.load %arg6[%c0_18, %c0_19] : memref<1x512xf32, #tpu.memory_space<vmem>>, vector<1x512xf32>
    %37 = vector.shape_cast %36 : vector<1x512xf32> to vector<1x1x512xf32>
    %38 = vector.broadcast %37 : vector<1x1x512xf32> to vector<2x8x512xf32>
    %39 = arith.mulf %35, %38 : vector<2x8x512xf32>
    %c0_20 = arith.constant 0 : index
    %c0_21 = arith.constant 0 : index
    %40 = vector.load %arg7[%c0_20, %c0_21] : memref<1x512xf32, #tpu.memory_space<vmem>>, vector<1x512xf32>
    %41 = vector.shape_cast %40 : vector<1x512xf32> to vector<1x1x512xf32>
    %42 = vector.broadcast %41 : vector<1x1x512xf32> to vector<2x8x512xf32>
    %43 = arith.addf %39, %42 : vector<2x8x512xf32>
    %cst_22 = arith.constant 0.000000e+00 : f32
    %44 = vector.broadcast %cst_22 : f32 to vector<2x8x512xf32>
    %45 = arith.maximumf %43, %44 : vector<2x8x512xf32>
    %46 = vector.shape_cast %45 : vector<2x8x512xf32> to vector<16x512xf32>
    %47 = arith.truncf %46 : vector<16x512xf32> to vector<16x512xbf16>
    %c0_23 = arith.constant 0 : index
    %c0_24 = arith.constant 0 : index
    %48 = vector.load %arg8[%c0_23, %c0_24] : memref<512x512xbf16, #tpu.memory_space<vmem>>, vector<512x512xbf16>
    %cst_25 = arith.constant dense<0.000000e+00> : vector<16x512xf32>
    %49 = tpu.matmul %47, %48, %cst_25 {dimension_numbers = #tpu.dot_dimension_numbers<[1], [0], [0], [1], [0, 0, 1, 1], [], []>} : vector<16x512xbf16>, vector<512x512xbf16>, vector<16x512xf32> -> vector<16x512xf32>
    %c0_26 = arith.constant 0 : index
    %c0_27 = arith.constant 0 : index
    %50 = vector.load %arg9[%c0_26, %c0_27] : memref<1x512xf32, #tpu.memory_space<vmem>>, vector<1x512xf32>
    %51 = vector.broadcast %50 : vector<1x512xf32> to vector<16x512xf32>
    %52 = arith.addf %49, %51 : vector<16x512xf32>
    %53 = arith.mulf %52, %52 : vector<16x512xf32>
    %cst_28 = arith.constant dense<0.000000e+00> : vector<16xf32>
    %54 = vector.multi_reduction <add>, %53, %cst_28 [1] : vector<16x512xf32> to vector<16xf32>
    %55 = vector.shape_cast %54 : vector<16xf32> to vector<16x1xf32>
    %cst_29 = arith.constant 1.000000e-24 : f32
    %56 = vector.broadcast %cst_29 : f32 to vector<16x1xf32>
    %57 = arith.maximumf %55, %56 : vector<16x1xf32>
    %58 = math.rsqrt %57 : vector<16x1xf32>
    %59 = vector.broadcast %58 : vector<16x1xf32> to vector<16x512xf32>
    %60 = arith.mulf %52, %59 : vector<16x512xf32>
    %61 = arith.truncf %60 : vector<16x512xf32> to vector<16x512xbf16>
    %c0_30 = arith.constant 0 : index
    %c0_31 = arith.constant 0 : index
    %62 = vector.load %arg10[%c0_30, %c0_31] : memref<16x512xbf16, #tpu.memory_space<vmem>>, vector<16x512xbf16>
    tpu.vector_store %arg10[%c0_30, %c0_31], %61 {strides = array<i32>} : memref<16x512xbf16, #tpu.memory_space<vmem>>, vector<16x512xbf16>,
    %63 = tpu.transpose %61, [1, 0] : vector<16x512xbf16> -> vector<512x16xbf16>
    %c0_32 = arith.constant 0 : index
    %c0_33 = arith.constant 0 : index
    %64 = vector.load %arg11[%c0_32, %c0_33] : memref<512x16xbf16, #tpu.memory_space<vmem>>, vector<512x16xbf16>
    tpu.vector_store %arg11[%c0_32, %c0_33], %63 {strides = array<i32>} : memref<512x16xbf16, #tpu.memory_space<vmem>>, vector<512x16xbf16>,
    %65 = vector.shape_cast %60 : vector<16x512xf32> to vector<2x8x512xf32>
    %66 = vector.extract_strided_slice %65 {offsets = [0, 0, 0], sizes = [1, 8, 512], strides = [1, 1, 1]} : vector<2x8x512xf32> to vector<1x8x512xf32>
    %67 = vector.shape_cast %66 : vector<1x8x512xf32> to vector<8x512xf32>
    %68 = vector.extract_strided_slice %65 {offsets = [1, 0, 0], sizes = [1, 8, 512], strides = [1, 1, 1]} : vector<2x8x512xf32> to vector<1x8x512xf32>
    %69 = vector.shape_cast %68 : vector<1x8x512xf32> to vector<8x512xf32>
    %70 = arith.mulf %67, %69 : vector<8x512xf32>
    %cst_34 = arith.constant dense<0.000000e+00> : vector<8xf32>
    %71 = vector.multi_reduction <add>, %70, %cst_34 [1] : vector<8x512xf32> to vector<8xf32>
    %72 = vector.shape_cast %71 : vector<8xf32> to vector<8x1xf32>
    %c0_35 = arith.constant 0 : index
    %c0_36 = arith.constant 0 : index
    %73 = vector.load %arg12[%c0_35, %c0_36] : memref<8x1xf32, #tpu.memory_space<vmem>>, vector<8x1xf32>
    tpu.vector_store %arg12[%c0_35, %c0_36], %72 {strides = array<i32>} : memref<8x1xf32, #tpu.memory_space<vmem>>, vector<8x1xf32>,
    return
  }
}

module attributes {stable_mosaic.version = 11 : i64} {
  func.func @ntxent_kernel(%arg0: i32, %arg1: i32, %arg2: memref<16x512xbf16, #tpu.memory_space<vmem>>, %arg3: memref<512x16xbf16, #tpu.memory_space<vmem>>, %arg4: memref<1x16xf32, #tpu.memory_space<vmem>>, %arg5: memref<16x1xf32, #tpu.memory_space<vmem>>, %arg6: memref<16x1xf32, #tpu.memory_space<vmem>>, %arg7: memref<16x1xf32, #tpu.memory_space<vmem>>) attributes {dimension_semantics = [#tpu.dimension_semantics<parallel>, #tpu.dimension_semantics<arbitrary>], iteration_bounds = array<i64: 1, 1>, scalar_prefetch = 0 : i64, scratch_operands = 1 : i64, tpu.core_type = #tpu.core_type<tc>, window_params = [{transform_indices = @transform_0, window_bounds = array<i64: 16, 512>}, {transform_indices = @transform_1, window_bounds = array<i64: 512, 16>}, {transform_indices = @transform_2, window_bounds = array<i64: 1, 16>}, {transform_indices = @transform_3, window_bounds = array<i64: 16, 1>}, {transform_indices = @transform_4, window_bounds = array<i64: 16, 1>}]} {
    %c0_i32 = arith.constant 0 : i32
    %0 = arith.cmpi eq, %arg1, %c0_i32 : i32
    %1 = arith.extui %0 : i1 to i32
    %c0_i32_0 = arith.constant 0 : i32
    %2 = arith.cmpi ne, %1, %c0_i32_0 : i32
    scf.if %2 {
      %cst_16 = arith.constant 0.000000e+00 : f32
      %31 = vector.broadcast %cst_16 : f32 to vector<16x1xf32>
      %c0_17 = arith.constant 0 : index
      %c0_18 = arith.constant 0 : index
      %32 = vector.load %arg7[%c0_17, %c0_18] : memref<16x1xf32, #tpu.memory_space<vmem>>, vector<16x1xf32>
      tpu.vector_store %arg7[%c0_17, %c0_18], %31 {strides = array<i32>} : memref<16x1xf32, #tpu.memory_space<vmem>>, vector<16x1xf32>,
    } else {
    }
    %c0 = arith.constant 0 : index
    %c0_1 = arith.constant 0 : index
    %3 = vector.load %arg2[%c0, %c0_1] : memref<16x512xbf16, #tpu.memory_space<vmem>>, vector<16x512xbf16>
    %c0_2 = arith.constant 0 : index
    %c0_3 = arith.constant 0 : index
    %4 = vector.load %arg3[%c0_2, %c0_3] : memref<512x16xbf16, #tpu.memory_space<vmem>>, vector<512x16xbf16>
    %cst = arith.constant dense<0.000000e+00> : vector<16x16xf32>
    %5 = tpu.matmul %3, %4, %cst {dimension_numbers = #tpu.dot_dimension_numbers<[1], [0], [0], [1], [0, 0, 1, 1], [], []>} : vector<16x512xbf16>, vector<512x16xbf16>, vector<16x16xf32> -> vector<16x16xf32>
    %cst_4 = arith.constant 2.000000e+00 : f32
    %6 = vector.broadcast %cst_4 : f32 to vector<16x16xf32>
    %7 = arith.mulf %5, %6 : vector<16x16xf32>
    %8 = math.exp %7 : vector<16x16xf32>
    %c16_i32 = arith.constant 16 : i32
    %9 = arith.muli %arg0, %c16_i32 : i32
    %10 = tpu.iota {dimensions = array<i32: 0>} : vector<16x16xi32>
    %11 = vector.broadcast %9 : i32 to vector<16x16xi32>
    %12 = arith.addi %11, %10 : vector<16x16xi32>
    %c16_i32_5 = arith.constant 16 : i32
    %13 = arith.muli %arg1, %c16_i32_5 : i32
    %14 = tpu.iota {dimensions = array<i32: 1>} : vector<16x16xi32>
    %15 = vector.broadcast %13 : i32 to vector<16x16xi32>
    %16 = arith.addi %15, %14 : vector<16x16xi32>
    %17 = arith.cmpi ne, %12, %16 : vector<16x16xi32>
    %c0_6 = arith.constant 0 : index
    %c0_7 = arith.constant 0 : index
    %18 = vector.load %arg4[%c0_6, %c0_7] : memref<1x16xf32, #tpu.memory_space<vmem>>, vector<1x16xf32>
    %19 = vector.broadcast %18 : vector<1x16xf32> to vector<16x16xf32>
    %20 = arith.mulf %8, %19 : vector<16x16xf32>
    %cst_8 = arith.constant 0.000000e+00 : f32
    %21 = vector.broadcast %cst_8 : f32 to vector<16x16xf32>
    %22 = arith.select %17, %20, %21 : vector<16x16xi1>, vector<16x16xf32>
    %c0_9 = arith.constant 0 : index
    %c0_10 = arith.constant 0 : index
    %23 = vector.load %arg7[%c0_9, %c0_10] : memref<16x1xf32, #tpu.memory_space<vmem>>, vector<16x1xf32>
    %cst_11 = arith.constant dense<0.000000e+00> : vector<16xf32>
    %24 = vector.multi_reduction <add>, %22, %cst_11 [1] : vector<16x16xf32> to vector<16xf32>
    %25 = vector.shape_cast %24 : vector<16xf32> to vector<16x1xf32>
    %26 = arith.addf %23, %25 : vector<16x1xf32>
    %c0_12 = arith.constant 0 : index
    %c0_13 = arith.constant 0 : index
    %27 = vector.load %arg7[%c0_12, %c0_13] : memref<16x1xf32, #tpu.memory_space<vmem>>, vector<16x1xf32>
    tpu.vector_store %arg7[%c0_12, %c0_13], %26 {strides = array<i32>} : memref<16x1xf32, #tpu.memory_space<vmem>>, vector<16x1xf32>,
    %c0_i32_14 = arith.constant 0 : i32
    %28 = arith.cmpi eq, %arg1, %c0_i32_14 : i32
    %29 = arith.extui %28 : i1 to i32
    %c0_i32_15 = arith.constant 0 : i32
    %30 = arith.cmpi ne, %29, %c0_i32_15 : i32
    scf.if %30 {
      %c0_16 = arith.constant 0 : index
      %c0_17 = arith.constant 0 : index
      %31 = vector.load %arg7[%c0_16, %c0_17] : memref<16x1xf32, #tpu.memory_space<vmem>>, vector<16x1xf32>
      %cst_18 = arith.constant 1.000000e-30 : f32
      %32 = vector.broadcast %cst_18 : f32 to vector<16x1xf32>
      %33 = arith.maximumf %31, %32 : vector<16x1xf32>
      %34 = math.log %33 : vector<16x1xf32>
      %c0_19 = arith.constant 0 : index
      %c0_20 = arith.constant 0 : index
      %35 = vector.load %arg5[%c0_19, %c0_20] : memref<16x1xf32, #tpu.memory_space<vmem>>, vector<16x1xf32>
      %cst_21 = arith.constant 2.000000e+00 : f32
      %36 = vector.broadcast %cst_21 : f32 to vector<16x1xf32>
      %37 = arith.mulf %35, %36 : vector<16x1xf32>
      %38 = arith.subf %34, %37 : vector<16x1xf32>
      %c0_22 = arith.constant 0 : index
      %c0_23 = arith.constant 0 : index
      %39 = vector.load %arg6[%c0_22, %c0_23] : memref<16x1xf32, #tpu.memory_space<vmem>>, vector<16x1xf32>
      tpu.vector_store %arg6[%c0_22, %c0_23], %38 {strides = array<i32>} : memref<16x1xf32, #tpu.memory_space<vmem>>, vector<16x1xf32>,
    } else {
    }
    return
  }
  func.func @transform_0(%arg0: i32, %arg1: i32) -> (i32, i32) {
    %c0_i32 = arith.constant 0 : i32
    %c0_i32_0 = arith.constant 0 : i32
    return %arg0, %c0_i32 : i32, i32
  }
  func.func @transform_1(%arg0: i32, %arg1: i32) -> (i32, i32) {
    %c0_i32 = arith.constant 0 : i32
    %c0_i32_0 = arith.constant 0 : i32
    return %c0_i32, %arg1 : i32, i32
  }
  func.func @transform_2(%arg0: i32, %arg1: i32) -> (i32, i32) {
    %c0_i32 = arith.constant 0 : i32
    %c0_i32_0 = arith.constant 0 : i32
    return %c0_i32, %arg1 : i32, i32
  }
  func.func @transform_3(%arg0: i32, %arg1: i32) -> (i32, i32) {
    %c0_i32 = arith.constant 0 : i32
    %c0_i32_0 = arith.constant 0 : i32
    return %arg0, %c0_i32 : i32, i32
  }
  func.func @transform_4(%arg0: i32, %arg1: i32) -> (i32, i32) {
    %c0_i32 = arith.constant 0 : i32
    %c0_i32_0 = arith.constant 0 : i32
    return %arg0, %c0_i32 : i32, i32
  }
}

</mosaic_0001>

<llo_original>
// kernel: simclr_loss.3
$region0: #{simclr_loss.3}
  #allocation0 [shape = 'u32[]', space=smem, size = 0x4, offset = 0x4, fixed_abs, tag = 'smem constant byte address 0x4 - core index']
  #allocation1 [shape = 'u32[144,128]{1,0:T(1,128)}', space=vmem, size = 0x12000, scoped, tag = 'internal scratch']
  #allocation2 [shape = 'f32[16,1]{1,0:T(8,128)}', space=vmem, size = 0x2000, scoped, tag = 'scratch operand']
  %s0 = inlined_call_operand.vmem [shape: bf16[16,512], index: 0, kind: input, shape index: {}]
  %s1 = inlined_call_operand.vmem [shape: bf16[512,16], index: 1, kind: input, shape index: {}]
  %s2 = inlined_call_operand.vmem [shape: f32[1,16], index: 2, kind: input, shape index: {}]
  %s3 = inlined_call_operand.vmem [shape: f32[16,1], index: 3, kind: input, shape index: {}]
  %s4 = inlined_call_operand.vmem [shape: f32[16,1], index: 4, kind: output, shape index: {}]
  %s5 = sld [smem:[#allocation0]]
  $region34: #{simclr_loss.3} parent=0
    _
  %s7 = ssub.s32 1, %s5
  %s8 = scalar_select 0, %s7, %s5
  // Predicated region
  $region2: #{simclr_loss.3} parent=0 // pred_check
    _
  $region3: #{simclr_loss.3} parent=0 // pred_check_branch
    %10 = sbr.rel (0) target = $region5
  $region4: #{simclr_loss.3} parent=0 // pred_region
    _
  $region5: #{simclr_loss.3} parent=0 // pred_fallthru
    _
  // Predicated region
  $region6: #{simclr_loss.3} parent=0 // pred_check
    _
  $region7: #{simclr_loss.3} parent=0 // pred_check_branch
    %12 = sbr.rel (0) target = $region9
  $region8: #{simclr_loss.3} parent=0 // pred_region
    _
  $region9: #{simclr_loss.3} parent=0 // pred_fallthru
    _
  // Predicated region
  $region10: #{simclr_loss.3} parent=0 // pred_check
    _
  $region11: #{simclr_loss.3} parent=0 // pred_check_branch
    %14 = sbr.rel (0) target = $region13
  $region12: #{simclr_loss.3} parent=0 // pred_region
    _
  $region13: #{simclr_loss.3} parent=0 // pred_fallthru
    _
  // Predicated region
  $region14: #{simclr_loss.3} parent=0 // pred_check
    _
  $region15: #{simclr_loss.3} parent=0 // pred_check_branch
    %16 = sbr.rel (0) target = $region17
  $region16: #{simclr_loss.3} parent=0 // pred_region
    _
  $region17: #{simclr_loss.3} parent=0 // pred_fallthru
    _
  %p18 = scmp.eq.s32.totalorder 0, 0
  // Predicated region
  $region18: #{simclr_loss.3} parent=0 // pred_check
    %p19 = pneg %p18
  $region19: #{simclr_loss.3} parent=0 // pred_check_branch
    %21 = sbr.rel (%p19) target = $region21
  $region20: #{simclr_loss.3} parent=0 // pred_region
    %vm22 = vcmask 7168
    %23 = vst.msk [vmem:[#allocation2] sm:$0xff] %vm22, 0.0
    %24 = vst.msk [vmem:[#allocation2 + $0x8] sm:$0xff] %vm22, 0.0
  $region21: #{simclr_loss.3} parent=0 // pred_fallthru
    _
  %v25 = vld [vmem:[%s0] sm:$0xff]
  %v26 = vld [vmem:[%s0 + $0x8] sm:$0xff]
  %v27 = vld [vmem:[%s0 + $0x10] sm:$0xff]
  %v28 = vld [vmem:[%s0 + $0x18] sm:$0xff]
  %v29 = vld [vmem:[%s1] sm:$0xf]
  %v30 = vld [vmem:[%s1 + $0x4] sm:$0xf]
  %v31 = vld [vmem:[%s1 + $0x8] sm:$0xf]
  %v32 = vld [vmem:[%s1 + $0xc] sm:$0xf]
  %v33 = vld [vmem:[%s1 + $0x10] sm:$0xf]
  %v34 = vld [vmem:[%s1 + $0x14] sm:$0xf]
  %v35 = vld [vmem:[%s1 + $0x18] sm:$0xf]
  %v36 = vld [vmem:[%s1 + $0x1c] sm:$0xf]
  %v37 = vld [vmem:[%s1 + $0x20] sm:$0xf]
  %v38 = vld [vmem:[%s1 + $0x24] sm:$0xf]
  %v39 = vld [vmem:[%s1 + $0x28] sm:$0xf]
  %v40 = vld [vmem:[%s1 + $0x2c] sm:$0xf]
  %v41 = vld [vmem:[%s1 + $0x30] sm:$0xf]
  %v42 = vld [vmem:[%s1 + $0x34] sm:$0xf]
  %v43 = vld [vmem:[%s1 + $0x38] sm:$0xf]
  %v44 = vld [vmem:[%s1 + $0x3c] sm:$0xf]
  %v45 = vld [vmem:[%s1 + $0x40] sm:$0xf]
  %v46 = vld [vmem:[%s1 + $0x44] sm:$0xf]
  %v47 = vld [vmem:[%s1 + $0x48] sm:$0xf]
  %v48 = vld [vmem:[%s1 + $0x4c] sm:$0xf]
  %v49 = vld [vmem:[%s1 + $0x50] sm:$0xf]
  %v50 = vld [vmem:[%s1 + $0x54] sm:$0xf]
  %v51 = vld [vmem:[%s1 + $0x58] sm:$0xf]
  %v52 = vld [vmem:[%s1 + $0x5c] sm:$0xf]
  %v53 = vld [vmem:[%s1 + $0x60] sm:$0xf]
  %v54 = vld [vmem:[%s1 + $0x64] sm:$0xf]
  %v55 = vld [vmem:[%s1 + $0x68] sm:$0xf]
  %v56 = vld [vmem:[%s1 + $0x6c] sm:$0xf]
  %v57 = vld [vmem:[%s1 + $0x70] sm:$0xf]
  %v58 = vld [vmem:[%s1 + $0x74] sm:$0xf]
  %v59 = vld [vmem:[%s1 + $0x78] sm:$0xf]
  %v60 = vld [vmem:[%s1 + $0x7c] sm:$0xf]
  %v61 = vld [vmem:[%s1 + $0x80] sm:$0xf]
  %v62 = vld [vmem:[%s1 + $0x84] sm:$0xf]
  %v63 = vld [vmem:[%s1 + $0x88] sm:$0xf]
  %v64 = vld [vmem:[%s1 + $0x8c] sm:$0xf]
  %v65 = vld [vmem:[%s1 + $0x90] sm:$0xf]
  %v66 = vld [vmem:[%s1 + $0x94] sm:$0xf]
  %v67 = vld [vmem:[%s1 + $0x98] sm:$0xf]
  %v68 = vld [vmem:[%s1 + $0x9c] sm:$0xf]
  %v69 = vld [vmem:[%s1 + $0xa0] sm:$0xf]
  %v70 = vld [vmem:[%s1 + $0xa4] sm:$0xf]
  %v71 = vld [vmem:[%s1 + $0xa8] sm:$0xf]
  %v72 = vld [vmem:[%s1 + $0xac] sm:$0xf]
  %v73 = vld [vmem:[%s1 + $0xb0] sm:$0xf]
  %v74 = vld [vmem:[%s1 + $0xb4] sm:$0xf]
  %v75 = vld [vmem:[%s1 + $0xb8] sm:$0xf]
  %v76 = vld [vmem:[%s1 + $0xbc] sm:$0xf]
  %v77 = vld [vmem:[%s1 + $0xc0] sm:$0xf]
  %v78 = vld [vmem:[%s1 + $0xc4] sm:$0xf]
  %v79 = vld [vmem:[%s1 + $0xc8] sm:$0xf]
  %v80 = vld [vmem:[%s1 + $0xcc] sm:$0xf]
  %v81 = vld [vmem:[%s1 + $0xd0] sm:$0xf]
  %v82 = vld [vmem:[%s1 + $0xd4] sm:$0xf]
  %v83 = vld [vmem:[%s1 + $0xd8] sm:$0xf]
  %v84 = vld [vmem:[%s1 + $0xdc] sm:$0xf]
  %v85 = vld [vmem:[%s1 + $0xe0] sm:$0xf]
  %v86 = vld [vmem:[%s1 + $0xe4] sm:$0xf]
  %v87 = vld [vmem:[%s1 + $0xe8] sm:$0xf]
  %v88 = vld [vmem:[%s1 + $0xec] sm:$0xf]
  %v89 = vld [vmem:[%s1 + $0xf0] sm:$0xf]
  %v90 = vld [vmem:[%s1 + $0xf4] sm:$0xf]
  %v91 = vld [vmem:[%s1 + $0xf8] sm:$0xf]
  %v92 = vld [vmem:[%s1 + $0xfc] sm:$0xf]
  %v97 = vunpack.c.l.b16 %v25
  %v98 = vunpack.c.h.b16 %v25
  %v99 = vunpack.c.l.b16 %v26
  %v100 = vunpack.c.h.b16 %v26
  %v101 = vunpack.c.l.b16 %v27
  %v102 = vunpack.c.h.b16 %v27
  %v103 = vunpack.c.l.b16 %v28
  %v104 = vunpack.c.h.b16 %v28
  %v105 = vpack.c.b16 %v101, %v97
  %v106 = vpack.c.b16 %v102, %v98
  %v107 = vpack.c.b16 %v103, %v99
  %v108 = vpack.c.b16 %v104, %v100
  %v177 = vunpack.c.l.b16 %v29
  %v178 = vunpack.c.l.b16 %v30
  %v179 = vunpack.c.l.b16 %v31
  %v180 = vunpack.c.l.b16 %v32
  %v181 = vunpack.c.l.b16 %v33
  %v182 = vunpack.c.l.b16 %v34
  %v183 = vunpack.c.l.b16 %v35
  %v184 = vunpack.c.l.b16 %v36
  %v185 = vunpack.c.l.b16 %v37
  %v186 = vunpack.c.l.b16 %v38
  %v187 = vunpack.c.l.b16 %v39
  %v188 = vunpack.c.l.b16 %v40
  %v189 = vunpack.c.l.b16 %v41
  %v190 = vunpack.c.l.b16 %v42
  %v191 = vunpack.c.l.b16 %v43
  %v192 = vunpack.c.l.b16 %v44
  %v193 = vunpack.c.l.b16 %v45
  %v194 = vunpack.c.l.b16 %v46
  %v195 = vunpack.c.l.b16 %v47
  %v196 = vunpack.c.l.b16 %v48
  %v197 = vunpack.c.l.b16 %v49
  %v198 = vunpack.c.l.b16 %v50
  %v199 = vunpack.c.l.b16 %v51
  %v200 = vunpack.c.l.b16 %v52
  %v201 = vunpack.c.l.b16 %v53
  %v202 = vunpack.c.l.b16 %v54
  %v203 = vunpack.c.l.b16 %v55
  %v204 = vunpack.c.l.b16 %v56
  %v205 = vunpack.c.l.b16 %v57
  %v206 = vunpack.c.l.b16 %v58
  %v207 = vunpack.c.l.b16 %v59
  %v208 = vunpack.c.l.b16 %v60
  %v209 = vunpack.c.l.b16 %v61
  %v210 = vunpack.c.l.b16 %v62
  %v211 = vunpack.c.l.b16 %v63
  %v212 = vunpack.c.l.b16 %v64
  %v213 = vunpack.c.l.b16 %v65
  %v214 = vunpack.c.l.b16 %v66
  %v215 = vunpack.c.l.b16 %v67
  %v216 = vunpack.c.l.b16 %v68
  %v217 = vunpack.c.l.b16 %v69
  %v218 = vunpack.c.l.b16 %v70
  %v219 = vunpack.c.l.b16 %v71
  %v220 = vunpack.c.l.b16 %v72
  %v221 = vunpack.c.l.b16 %v73
  %v222 = vunpack.c.l.b16 %v74
  %v223 = vunpack.c.l.b16 %v75
  %v224 = vunpack.c.l.b16 %v76
  %v225 = vunpack.c.l.b16 %v77
  %v226 = vunpack.c.l.b16 %v78
  %v227 = vunpack.c.l.b16 %v79
  %v228 = vunpack.c.l.b16 %v80
  %v229 = vunpack.c.l.b16 %v81
  %v230 = vunpack.c.l.b16 %v82
  %v231 = vunpack.c.l.b16 %v83
  %v232 = vunpack.c.l.b16 %v84
  %v233 = vunpack.c.l.b16 %v85
  %v234 = vunpack.c.l.b16 %v86
  %v235 = vunpack.c.l.b16 %v87
  %v236 = vunpack.c.l.b16 %v88
  %v237 = vunpack.c.l.b16 %v89
  %v238 = vunpack.c.l.b16 %v90
  %v239 = vunpack.c.l.b16 %v91
  %v240 = vunpack.c.l.b16 %v92
  %v241 = vpack.c.b16 %v178, %v177
  %v242 = vpack.c.b16 %v180, %v179
  %v243 = vpack.c.b16 %v182, %v181
  %v244 = vpack.c.b16 %v184, %v183
  %v245 = vpack.c.b16 %v186, %v185
  %v246 = vpack.c.b16 %v188, %v187
  %v247 = vpack.c.b16 %v190, %v189
  %v248 = vpack.c.b16 %v192, %v191
  %v249 = vpack.c.b16 %v194, %v193
  %v250 = vpack.c.b16 %v196, %v195
  %v251 = vpack.c.b16 %v198, %v197
  %v252 = vpack.c.b16 %v200, %v199
  %v253 = vpack.c.b16 %v202, %v201
  %v254 = vpack.c.b16 %v204, %v203
  %v255 = vpack.c.b16 %v206, %v205
  %v256 = vpack.c.b16 %v208, %v207
  %v257 = vpack.c.b16 %v210, %v209
  %v258 = vpack.c.b16 %v212, %v211
  %v259 = vpack.c.b16 %v214, %v213
  %v260 = vpack.c.b16 %v216, %v215
  %v261 = vpack.c.b16 %v218, %v217
  %v262 = vpack.c.b16 %v220, %v219
  %v263 = vpack.c.b16 %v222, %v221
  %v264 = vpack.c.b16 %v224, %v223
  %v265 = vpack.c.b16 %v226, %v225
  %v266 = vpack.c.b16 %v228, %v227
  %v267 = vpack.c.b16 %v230, %v229
  %v268 = vpack.c.b16 %v232, %v231
  %v269 = vpack.c.b16 %v234, %v233
  %v270 = vpack.c.b16 %v236, %v235
  %v271 = vpack.c.b16 %v238, %v237
  %v272 = vpack.c.b16 %v240, %v239
  %305 = vmatprep.subr.bf16.mxu0 0
  %306 = vmatpush1.bf16.msra.mxu0 %v248
  %307 = vmatprep.subr.bf16.mxu0 0
  %308 = vmatpush1.bf16.msra.mxu0 %v247
  %309 = vmatprep.subr.bf16.mxu0 0
  %310 = vmatpush1.bf16.msra.mxu0 %v246
  %311 = vmatprep.subr.bf16.mxu0 0
  %312 = vmatpush1.bf16.msra.mxu0 %v245
  %313 = vmatprep.subr.bf16.mxu0 0
  %314 = vmatpush1.bf16.msra.mxu0 %v244
  %315 = vmatprep.subr.bf16.mxu0 0
  %316 = vmatpush1.bf16.msra.mxu0 %v243
  %317 = vmatprep.subr.bf16.mxu0 0
  %318 = vmatpush1.bf16.msra.mxu0 %v242
  %319 = vmatprep.subr.bf16.mxu0 0
  %320 = vmatpush1.bf16.msra.mxu0 %v241
  %321 = vmatprep.subr.bf16.mxu0 0
  %322 = vmatpush2.bf16.msra.mxu0 %v256
  %323 = vmatprep.subr.bf16.mxu0 0
  %324 = vmatpush2.bf16.msra.mxu0 %v255
  %325 = vmatprep.subr.bf16.mxu0 0
  %326 = vmatpush2.bf16.msra.mxu0 %v254
  %327 = vmatprep.subr.bf16.mxu0 0
  %328 = vmatpush2.bf16.msra.mxu0 %v253
  %329 = vmatprep.subr.bf16.mxu0 0
  %330 = vmatpush2.bf16.msra.mxu0 %v252
  %331 = vmatprep.subr.bf16.mxu0 0
  %332 = vmatpush2.bf16.msra.mxu0 %v251
  %333 = vmatprep.subr.bf16.mxu0 0
  %334 = vmatpush2.bf16.msra.mxu0 %v250
  %335 = vmatprep.subr.bf16.mxu0 0
  %336 = vmatpush2.bf16.msra.mxu0 %v249
  %337 = vmatprep.mubr.bf16.mxu0 %v106
  %338 = vmatmul.mubr.bf16.gmra.mxu0 %v105
  %v339 = vpop.f32.mrf.mxu0
  %v340 = vadd.f32 0.0, %v339
  %v341 = vpop.f32.mrf.mxu0
  %v342 = vpop.f32.mrf.mxu0
  %v343 = vadd.f32 0.0, %v342
  %v344 = vpop.f32.mrf.mxu0
  %345 = vdwg.mxu0
  %346 = vmatprep.subr.bf16.mxu0 0
  %347 = vmatpush1.bf16.msra.mxu0 %v264
  %348 = vmatprep.subr.bf16.mxu0 0
  %349 = vmatpush1.bf16.msra.mxu0 %v263
  %350 = vmatprep.subr.bf16.mxu0 0
  %351 = vmatpush1.bf16.msra.mxu0 %v262
  %352 = vmatprep.subr.bf16.mxu0 0
  %353 = vmatpush1.bf16.msra.mxu0 %v261
  %354 = vmatprep.subr.bf16.mxu0 0
  %355 = vmatpush1.bf16.msra.mxu0 %v260
  %356 = vmatprep.subr.bf16.mxu0 0
  %357 = vmatpush1.bf16.msra.mxu0 %v259
  %358 = vmatprep.subr.bf16.mxu0 0
  %359 = vmatpush1.bf16.msra.mxu0 %v258
  %360 = vmatprep.subr.bf16.mxu0 0
  %361 = vmatpush1.bf16.msra.mxu0 %v257
  %362 = vmatprep.subr.bf16.mxu0 0
  %363 = vmatpush2.bf16.msra.mxu0 %v272
  %364 = vmatprep.subr.bf16.mxu0 0
  %365 = vmatpush2.bf16.msra.mxu0 %v271
  %366 = vmatprep.subr.bf16.mxu0 0
  %367 = vmatpush2.bf16.msra.mxu0 %v270
  %368 = vmatprep.subr.bf16.mxu0 0
  %369 = vmatpush2.bf16.msra.mxu0 %v269
  %370 = vmatprep.subr.bf16.mxu0 0
  %371 = vmatpush2.bf16.msra.mxu0 %v268
  %372 = vmatprep.subr.bf16.mxu0 0
  %373 = vmatpush2.bf16.msra.mxu0 %v267
  %374 = vmatprep.subr.bf16.mxu0 0
  %375 = vmatpush2.bf16.msra.mxu0 %v266
  %376 = vmatprep.subr.bf16.mxu0 0
  %377 = vmatpush2.bf16.msra.mxu0 %v265
  %378 = vmatprep.mubr.bf16.mxu0 %v108
  %379 = vmatmul.mubr.bf16.gmra.mxu0 %v107
  %v380 = vpop.f32.mrf.mxu0
  %v381 = vadd.f32 %v340, %v380
  %v382 = vpop.f32.mrf.mxu0
  %v383 = vpop.f32.mrf.mxu0
  %v384 = vadd.f32 %v343, %v383
  %v385 = vpop.f32.mrf.mxu0
  %386 = vdwg.mxu0
  %v387 = vmul.f32 %v381, 2.0
  %v388 = vmul.f32 %v384, 2.0
  %v389 = vmul.f32 %v387, 1.442695
  %v390 = vpow.pop %v389
  %v391 = vmul.f32 %v388, 1.442695
  %v392 = vpow.pop %v391
  %s393 = smul.u32 0, 16
  %v394 = vlaneseq
  %v395 = vshrl.u32 %v394, 7
  %v396 = vadd.s32 %v395, 8
  %v397 = vstv %s393
  %v398 = vadd.s32 %v397, %v395
  %v399 = vadd.s32 %v397, %v396
  %s400 = smul.u32 0, 16
  %v401 = vlaneseq
  %v402 = vand.u32 %v401, 127
  %v403 = vstv %s400
  %v404 = vadd.s32 %v403, %v402
  %vm405 = vcmp.ne.s32.totalorder %v398, %v404
  %vm406 = vcmp.ne.s32.totalorder %v399, %v404
  %v407 = vld [vmem:[%s2] sm:$0x1]
  %v409 = vlaneseq
  %v410 = vshrl.u32 %v409, 7
  %v411 = vsub.s32 0, %v410
  %v412 = vrot.slane %v407, %v411
  %v414 = vmul.f32 %v390, %v412
  %v415 = vmul.f32 %v392, %v412
  %v416 = vsel %vm405, %v414, 0.0
  %v417 = vsel %vm406, %v415, 0.0
  %v418 = vld [vmem:[#allocation2] sm:$0xff]
  %v419 = vld [vmem:[#allocation2 + $0x8] sm:$0xff]
  %vm420 = vcmask 130048
  %v421 = vsel %vm420, %v416, 0.0
  %422 = vadd.xlane.f32.xlu0 %v421
  %v423 = vpop.xlane.xlu0 %422
  %v424 = vsel %vm420, %v417, 0.0
  %425 = vadd.xlane.f32.xlu0 %v424
  %v426 = vpop.xlane.xlu0 %425
  %v427 = vadd.f32 %v418, %v423
  %v428 = vadd.f32 %v419, %v426
  %vm429 = vcmask 7168
  %430 = vst.msk [vmem:[#allocation2] sm:$0xff] %vm429, %v427
  %431 = vst.msk [vmem:[#allocation2 + $0x8] sm:$0xff] %vm429, %v428
  // Predicated region
  $region22: #{simclr_loss.3} parent=0 // pred_check
    %p432 = pneg %p18
  $region23: #{simclr_loss.3} parent=0 // pred_check_branch
    %434 = sbr.rel (%p432) target = $region25
  $region24: #{simclr_loss.3} parent=0 // pred_region
    %v435 = vld [vmem:[#allocation2] sm:$0xff]
    %v436 = vld [vmem:[#allocation2 + $0x8] sm:$0xff]
    %v437 = vmax.f32 %v435, 1e-30
    %v438 = vmax.f32 %v436, 1e-30
    %v439 = vlog2.pop %v437
    %v440 = vmul.f32 %v439, 0.6931472
    %v441 = vlog2.pop %v438
    %v442 = vmul.f32 %v441, 0.6931472
    %v443 = vld [vmem:[%s3] sm:$0xff]
    %v444 = vld [vmem:[%s3 + $0x8] sm:$0xff]
    %v445 = vmul.f32 %v443, 2.0
    %v446 = vmul.f32 %v444, 2.0
    %v447 = vsub.f32 %v440, %v445
    %v448 = vsub.f32 %v442, %v446
    %449 = vst.msk [vmem:[%s4] sm:$0xff] %vm429, %v447
    %450 = vst.msk [vmem:[%s4 + $0x8] sm:$0xff] %vm429, %v448
  $region25: #{simclr_loss.3} parent=0 // pred_fallthru
    _
  // Predicated region
  $region26: #{simclr_loss.3} parent=0 // pred_check
    _
  $region27: #{simclr_loss.3} parent=0 // pred_check_branch
    %452 = sbr.rel (0) target = $region29
  $region28: #{simclr_loss.3} parent=0 // pred_region
    _
  $region29: #{simclr_loss.3} parent=0 // pred_fallthru
    _
  // Predicated region
  $region30: #{simclr_loss.3} parent=0 // pred_check
    _
  $region31: #{simclr_loss.3} parent=0 // pred_check_branch
    %454 = sbr.rel (0) target = $region33
  $region32: #{simclr_loss.3} parent=0 // pred_region
    _
  $region33: #{simclr_loss.3} parent=0 // pred_fallthru
    _

// kernel: simclr_loss.2
$region0: #{simclr_loss.2}
  #allocation0 [shape = 'u32[]', space=smem, size = 0x4, offset = 0x4, fixed_abs, tag = 'smem constant byte address 0x4 - core index']
  #allocation1 [shape = 'u32[144,128]{1,0:T(1,128)}', space=vmem, size = 0x12000, scoped, tag = 'internal scratch']
  %s0 = inlined_call_operand.vmem [shape: bf16[16,1024], index: 0, kind: input, shape index: {}]
  %s1 = inlined_call_operand.vmem [shape: f32[2,8,1], index: 1, kind: input, shape index: {}]
  %s2 = inlined_call_operand.vmem [shape: bf16[1024,128], index: 2, kind: input, shape index: {}]
  %s3 = inlined_call_operand.vmem [shape: f32[1,128], index: 3, kind: input, shape index: {}]
  %s4 = inlined_call_operand.vmem [shape: bf16[128,512], index: 4, kind: input, shape index: {}]
  %s5 = inlined_call_operand.vmem [shape: f32[1,512], index: 5, kind: input, shape index: {}]
  %s6 = inlined_call_operand.vmem [shape: f32[1,512], index: 6, kind: input, shape index: {}]
  %s7 = inlined_call_operand.vmem [shape: f32[1,512], index: 7, kind: input, shape index: {}]
  %s8 = inlined_call_operand.vmem [shape: bf16[512,512], index: 8, kind: input, shape index: {}]
  %s9 = inlined_call_operand.vmem [shape: f32[1,512], index: 9, kind: input, shape index: {}]
  %s10 = inlined_call_operand.vmem [shape: bf16[16,512], index: 10, kind: output, shape index: {0}]
  %s11 = inlined_call_operand.vmem [shape: bf16[512,16], index: 11, kind: output, shape index: {1}]
  %s12 = inlined_call_operand.vmem [shape: f32[8,1], index: 12, kind: output, shape index: {2}]
  %13 = xla_tuple %s10, %s11, %s12
  %s14 = sld [smem:[#allocation0]]
  $region66: #{simclr_loss.2} parent=0
    _
  %s16 = ssub.s32 1, %s14
  %s17 = scalar_select 0, %s16, %s14
  // Predicated region
  $region2: #{simclr_loss.2} parent=0 // pred_check
    _
  $region3: #{simclr_loss.2} parent=0 // pred_check_branch
    %19 = sbr.rel (0) target = $region5
  $region4: #{simclr_loss.2} parent=0 // pred_region
    _
  $region5: #{simclr_loss.2} parent=0 // pred_fallthru
    _
  // Predicated region
  $region6: #{simclr_loss.2} parent=0 // pred_check
    _
  $region7: #{simclr_loss.2} parent=0 // pred_check_branch
    %21 = sbr.rel (0) target = $region9
  $region8: #{simclr_loss.2} parent=0 // pred_region
    _
  $region9: #{simclr_loss.2} parent=0 // pred_fallthru
    _
  // Predicated region
  $region10: #{simclr_loss.2} parent=0 // pred_check
    _
  $region11: #{simclr_loss.2} parent=0 // pred_check_branch
    %23 = sbr.rel (0) target = $region13
  $region12: #{simclr_loss.2} parent=0 // pred_region
    _
  $region13: #{simclr_loss.2} parent=0 // pred_fallthru
    _
  // Predicated region
  $region14: #{simclr_loss.2} parent=0 // pred_check
    _
  $region15: #{simclr_loss.2} parent=0 // pred_check_branch
    %25 = sbr.rel (0) target = $region17
  $region16: #{simclr_loss.2} parent=0 // pred_region
    _
  $region17: #{simclr_loss.2} parent=0 // pred_fallthru
    _
  // Predicated region
  $region18: #{simclr_loss.2} parent=0 // pred_check
    _
  $region19: #{simclr_loss.2} parent=0 // pred_check_branch
    %27 = sbr.rel (0) target = $region21
  $region20: #{simclr_loss.2} parent=0 // pred_region
    _
  $region21: #{simclr_loss.2} parent=0 // pred_fallthru
    _
  // Predicated region
  $region22: #{simclr_loss.2} parent=0 // pred_check
    _
  $region23: #{simclr_loss.2} parent=0 // pred_check_branch
    %29 = sbr.rel (0) target = $region25
  $region24: #{simclr_loss.2} parent=0 // pred_region
    _
  $region25: #{simclr_loss.2} parent=0 // pred_fallthru
    _
  // Predicated region
  $region26: #{simclr_loss.2} parent=0 // pred_check
    _
  $region27: #{simclr_loss.2} parent=0 // pred_check_branch
    %31 = sbr.rel (0) target = $region29
  $region28: #{simclr_loss.2} parent=0 // pred_region
    _
  $region29: #{simclr_loss.2} parent=0 // pred_fallthru
    _
  // Predicated region
  $region30: #{simclr_loss.2} parent=0 // pred_check
    _
  $region31: #{simclr_loss.2} parent=0 // pred_check_branch
    %33 = sbr.rel (0) target = $region33
  $region32: #{simclr_loss.2} parent=0 // pred_region
    _
  $region33: #{simclr_loss.2} parent=0 // pred_fallthru
    _
  // Predicated region
  $region34: #{simclr_loss.2} parent=0 // pred_check
    _
  $region35: #{simclr_loss.2} parent=0 // pred_check_branch
    %35 = sbr.rel (0) target = $region37
  $region36: #{simclr_loss.2} parent=0 // pred_region
    _
  $region37: #{simclr_loss.2} parent=0 // pred_fallthru
    _
  // Predicated region
  $region38: #{simclr_loss.2} parent=0 // pred_check
    _
  $region39: #{simclr_loss.2} parent=0 // pred_check_branch
    %37 = sbr.rel (0) target = $region41
  $region40: #{simclr_loss.2} parent=0 // pred_region
    _
  $region41: #{simclr_loss.2} parent=0 // pred_fallthru
    _
  %v39 = vld [vmem:[%s0] sm:$0xff]
  %v40 = vld [vmem:[%s0 + $0x8] sm:$0xff]
  %v41 = vld [vmem:[%s0 + $0x10] sm:$0xff]
  %v42 = vld [vmem:[%s0 + $0x18] sm:$0xff]
  %v43 = vld [vmem:[%s0 + $0x20] sm:$0xff]
  %v44 = vld [vmem:[%s0 + $0x28] sm:$0xff]
  %v45 = vld [vmem:[%s0 + $0x30] sm:$0xff]
  %v46 = vld [vmem:[%s0 + $0x38] sm:$0xff]
  %v47 = vld [vmem:[%s2] sm:$0xf]
  %v48 = vld [vmem:[%s2 + $0x4] sm:$0xf]
  %v49 = vld [vmem:[%s2 + $0x8] sm:$0xf]
  %v50 = vld [vmem:[%s2 + $0xc] sm:$0xf]
  %v51 = vld [vmem:[%s2 + $0x10] sm:$0xf]
  %v52 = vld [vmem:[%s2 + $0x14] sm:$0xf]
  %v53 = vld [vmem:[%s2 + $0x18] sm:$0xf]
  %v54 = vld [vmem:[%s2 + $0x1c] sm:$0xf]
  %v55 = vld [vmem:[%s2 + $0x20] sm:$0xf]
  %v56 = vld [vmem:[%s2 + $0x24] sm:$0xf]
  %v57 = vld [vmem:[%s2 + $0x28] sm:$0xf]
  %v58 = vld [vmem:[%s2 + $0x2c] sm:$0xf]
  %v59 = vld [vmem:[%s2 + $0x30] sm:$0xf]
  %v60 = vld [vmem:[%s2 + $0x34] sm:$0xf]
  %v61 = vld [vmem:[%s2 + $0x38] sm:$0xf]
  %v62 = vld [vmem:[%s2 + $0x3c] sm:$0xf]
  %v63 = vld [vmem:[%s2 + $0x40] sm:$0xf]
  %v64 = vld [vmem:[%s2 + $0x44] sm:$0xf]
  %v65 = vld [vmem:[%s2 + $0x48] sm:$0xf]
  %v66 = vld [vmem:[%s2 + $0x4c] sm:$0xf]
  %v67 = vld [vmem:[%s2 + $0x50] sm:$0xf]
  %v68 = vld [vmem:[%s2 + $0x54] sm:$0xf]
  %v69 = vld [vmem:[%s2 + $0x58] sm:$0xf]
  %v70 = vld [vmem:[%s2 + $0x5c] sm:$0xf]
  %v71 = vld [vmem:[%s2 + $0x60] sm:$0xf]
  %v72 = vld [vmem:[%s2 + $0x64] sm:$0xf]
  %v73 = vld [vmem:[%s2 + $0x68] sm:$0xf]
  %v74 = vld [vmem:[%s2 + $0x6c] sm:$0xf]
  %v75 = vld [vmem:[%s2 + $0x70] sm:$0xf]
  %v76 = vld [vmem:[%s2 + $0x74] sm:$0xf]
  %v77 = vld [vmem:[%s2 + $0x78] sm:$0xf]
  %v78 = vld [vmem:[%s2 + $0x7c] sm:$0xf]
  %v79 = vld [vmem:[%s2 + $0x80] sm:$0xf]
  %v80 = vld [vmem:[%s2 + $0x84] sm:$0xf]
  %v81 = vld [vmem:[%s2 + $0x88] sm:$0xf]
  %v82 = vld [vmem:[%s2 + $0x8c] sm:$0xf]
  %v83 = vld [vmem:[%s2 + $0x90] sm:$0xf]
  %v84 = vld [vmem:[%s2 + $0x94] sm:$0xf]
  %v85 = vld [vmem:[%s2 + $0x98] sm:$0xf]
  %v86 = vld [vmem:[%s2 + $0x9c] sm:$0xf]
  %v87 = vld [vmem:[%s2 + $0xa0] sm:$0xf]
  %v88 = vld [vmem:[%s2 + $0xa4] sm:$0xf]
  %v89 = vld [vmem:[%s2 + $0xa8] sm:$0xf]
  %v90 = vld [vmem:[%s2 + $0xac] sm:$0xf]
  %v91 = vld [vmem:[%s2 + $0xb0] sm:$0xf]
  %v92 = vld [vmem:[%s2 + $0xb4] sm:$0xf]
  %v93 = vld [vmem:[%s2 + $0xb8] sm:$0xf]
  %v94 = vld [vmem:[%s2 + $0xbc] sm:$0xf]
  %v95 = vld [vmem:[%s2 + $0xc0] sm:$0xf]
  %v96 = vld [vmem:[%s2 + $0xc4] sm:$0xf]
  %v97 = vld [vmem:[%s2 + $0xc8] sm:$0xf]
  %v98 = vld [vmem:[%s2 + $0xcc] sm:$0xf]
  %v99 = vld [vmem:[%s2 + $0xd0] sm:$0xf]
  %v100 = vld [vmem:[%s2 + $0xd4] sm:$0xf]
  %v101 = vld [vmem:[%s2 + $0xd8] sm:$0xf]
  %v102 = vld [vmem:[%s2 + $0xdc] sm:$0xf]
  %v103 = vld [vmem:[%s2 + $0xe0] sm:$0xf]
  %v104 = vld [vmem:[%s2 + $0xe4] sm:$0xf]
  %v105 = vld [vmem:[%s2 + $0xe8] sm:$0xf]
  %v106 = vld [vmem:[%s2 + $0xec] sm:$0xf]
  %v107 = vld [vmem:[%s2 + $0xf0] sm:$0xf]
  %v108 = vld [vmem:[%s2 + $0xf4] sm:$0xf]
  %v109 = vld [vmem:[%s2 + $0xf8] sm:$0xf]
  %v110 = vld [vmem:[%s2 + $0xfc] sm:$0xf]
  %v111 = vld [vmem:[%s2 + $0x100] sm:$0xf]
  %v112 = vld [vmem:[%s2 + $0x104] sm:$0xf]
  %v113 = vld [vmem:[%s2 + $0x108] sm:$0xf]
  %v114 = vld [vmem:[%s2 + $0x10c] sm:$0xf]
  %v115 = vld [vmem:[%s2 + $0x110] sm:$0xf]
  %v116 = vld [vmem:[%s2 + $0x114] sm:$0xf]
  %v117 = vld [vmem:[%s2 + $0x118] sm:$0xf]
  %v118 = vld [vmem:[%s2 + $0x11c] sm:$0xf]
  %v119 = vld [vmem:[%s2 + $0x120] sm:$0xf]
  %v120 = vld [vmem:[%s2 + $0x124] sm:$0xf]
  %v121 = vld [vmem:[%s2 + $0x128] sm:$0xf]
  %v122 = vld [vmem:[%s2 + $0x12c] sm:$0xf]
  %v123 = vld [vmem:[%s2 + $0x130] sm:$0xf]
  %v124 = vld [vmem:[%s2 + $0x134] sm:$0xf]
  %v125 = vld [vmem:[%s2 + $0x138] sm:$0xf]
  %v126 = vld [vmem:[%s2 + $0x13c] sm:$0xf]
  %v127 = vld [vmem:[%s2 + $0x140] sm:$0xf]
  %v128 = vld [vmem:[%s2 + $0x144] sm:$0xf]
  %v129 = vld [vmem:[%s2 + $0x148] sm:$0xf]
  %v130 = vld [vmem:[%s2 + $0x14c] sm:$0xf]
  %v131 = vld [vmem:[%s2 + $0x150] sm:$0xf]
  %v132 = vld [vmem:[%s2 + $0x154] sm:$0xf]
  %v133 = vld [vmem:[%s2 + $0x158] sm:$0xf]
  %v134 = vld [vmem:[%s2 + $0x15c] sm:$0xf]
  %v135 = vld [vmem:[%s2 + $0x160] sm:$0xf]
  %v136 = vld [vmem:[%s2 + $0x164] sm:$0xf]
  %v137 = vld [vmem:[%s2 + $0x168] sm:$0xf]
  %v138 = vld [vmem:[%s2 + $0x16c] sm:$0xf]
  %v139 = vld [vmem:[%s2 + $0x170] sm:$0xf]
  %v140 = vld [vmem:[%s2 + $0x174] sm:$0xf]
  %v141 = vld [vmem:[%s2 + $0x178] sm:$0xf]
  %v142 = vld [vmem:[%s2 + $0x17c] sm:$0xf]
  %v143 = vld [vmem:[%s2 + $0x180] sm:$0xf]
  %v144 = vld [vmem:[%s2 + $0x184] sm:$0xf]
  %v145 = vld [vmem:[%s2 + $0x188] sm:$0xf]
  %v146 = vld [vmem:[%s2 + $0x18c] sm:$0xf]
  %v147 = vld [vmem:[%s2 + $0x190] sm:$0xf]
  %v148 = vld [vmem:[%s2 + $0x194] sm:$0xf]
  %v149 = vld [vmem:[%s2 + $0x198] sm:$0xf]
  %v150 = vld [vmem:[%s2 + $0x19c] sm:$0xf]
  %v151 = vld [vmem:[%s2 + $0x1a0] sm:$0xf]
  %v152 = vld [vmem:[%s2 + $0x1a4] sm:$0xf]
  %v153 = vld [vmem:[%s2 + $0x1a8] sm:$0xf]
  %v154 = vld [vmem:[%s2 + $0x1ac] sm:$0xf]
  %v155 = vld [vmem:[%s2 + $0x1b0] sm:$0xf]
  %v156 = vld [vmem:[%s2 + $0x1b4] sm:$0xf]
  %v157 = vld [vmem:[%s2 + $0x1b8] sm:$0xf]
  %v158 = vld [vmem:[%s2 + $0x1bc] sm:$0xf]
  %v159 = vld [vmem:[%s2 + $0x1c0] sm:$0xf]
  %v160 = vld [vmem:[%s2 + $0x1c4] sm:$0xf]
  %v161 = vld [vmem:[%s2 + $0x1c8] sm:$0xf]
  %v162 = vld [vmem:[%s2 + $0x1cc] sm:$0xf]
  %v163 = vld [vmem:[%s2 + $0x1d0] sm:$0xf]
  %v164 = vld [vmem:[%s2 + $0x1d4] sm:$0xf]
  %v165 = vld [vmem:[%s2 + $0x1d8] sm:$0xf]
  %v166 = vld [vmem:[%s2 + $0x1dc] sm:$0xf]
  %v167 = vld [vmem:[%s2 + $0x1e0] sm:$0xf]
  %v168 = vld [vmem:[%s2 + $0x1e4] sm:$0xf]
  %v169 = vld [vmem:[%s2 + $0x1e8] sm:$0xf]
  %v170 = vld [vmem:[%s2 + $0x1ec] sm:$0xf]
  %v171 = vld [vmem:[%s2 + $0x1f0] sm:$0xf]
  %v172 = vld [vmem:[%s2 + $0x1f4] sm:$0xf]
  %v173 = vld [vmem:[%s2 + $0x1f8] sm:$0xf]
  %v174 = vld [vmem:[%s2 + $0x1fc] sm:$0xf]
  %v175 = vld [vmem:[%s3] sm:$0x1]
  %v177 = vlaneseq
  %v178 = vshrl.u32 %v177, 7
  %v179 = vsub.s32 0, %v178
  %v180 = vrot.slane %v175, %v179
  %v190 = vunpack.c.l.b16 %v39
  %v191 = vunpack.c.h.b16 %v39
  %v192 = vunpack.c.l.b16 %v40
  %v193 = vunpack.c.h.b16 %v40
  %v194 = vunpack.c.l.b16 %v41
  %v195 = vunpack.c.h.b16 %v41
  %v196 = vunpack.c.l.b16 %v42
  %v197 = vunpack.c.h.b16 %v42
  %v198 = vunpack.c.l.b16 %v43
  %v199 = vunpack.c.h.b16 %v43
  %v200 = vunpack.c.l.b16 %v44
  %v201 = vunpack.c.h.b16 %v44
  %v202 = vunpack.c.l.b16 %v45
  %v203 = vunpack.c.h.b16 %v45
  %v204 = vunpack.c.l.b16 %v46
  %v205 = vunpack.c.h.b16 %v46
  %v206 = vpack.c.b16 %v198, %v190
  %v207 = vpack.c.b16 %v199, %v191
  %v208 = vpack.c.b16 %v200, %v192
  %v209 = vpack.c.b16 %v201, %v193
  %v210 = vpack.c.b16 %v202, %v194
  %v211 = vpack.c.b16 %v203, %v195
  %v212 = vpack.c.b16 %v204, %v196
  %v213 = vpack.c.b16 %v205, %v197
  %v350 = vunpack.c.l.b16 %v47
  %v351 = vunpack.c.l.b16 %v48
  %v352 = vunpack.c.l.b16 %v49
  %v353 = vunpack.c.l.b16 %v50
  %v354 = vunpack.c.l.b16 %v51
  %v355 = vunpack.c.l.b16 %v52
  %v356 = vunpack.c.l.b16 %v53
  %v357 = vunpack.c.l.b16 %v54
  %v358 = vunpack.c.l.b16 %v55
  %v359 = vunpack.c.l.b16 %v56
  %v360 = vunpack.c.l.b16 %v57
  %v361 = vunpack.c.l.b16 %v58
  %v362 = vunpack.c.l.b16 %v59
  %v363 = vunpack.c.l.b16 %v60
  %v364 = vunpack.c.l.b16 %v61
  %v365 = vunpack.c.l.b16 %v62
  %v366 = vunpack.c.l.b16 %v63
  %v367 = vunpack.c.l.b16 %v64
  %v368 = vunpack.c.l.b16 %v65
  %v369 = vunpack.c.l.b16 %v66
  %v370 = vunpack.c.l.b16 %v67
  %v371 = vunpack.c.l.b16 %v68
  %v372 = vunpack.c.l.b16 %v69
  %v373 = vunpack.c.l.b16 %v70
  %v374 = vunpack.c.l.b16 %v71
  %v375 = vunpack.c.l.b16 %v72
  %v376 = vunpack.c.l.b16 %v73
  %v377 = vunpack.c.l.b16 %v74
  %v378 = vunpack.c.l.b16 %v75
  %v379 = vunpack.c.l.b16 %v76
  %v380 = vunpack.c.l.b16 %v77
  %v381 = vunpack.c.l.b16 %v78
  %v382 = vunpack.c.l.b16 %v79
  %v383 = vunpack.c.l.b16 %v80
  %v384 = vunpack.c.l.b16 %v81
  %v385 = vunpack.c.l.b16 %v82
  %v386 = vunpack.c.l.b16 %v83
  %v387 = vunpack.c.l.b16 %v84
  %v388 = vunpack.c.l.b16 %v85
  %v389 = vunpack.c.l.b16 %v86
  %v390 = vunpack.c.l.b16 %v87
  %v391 = vunpack.c.l.b16 %v88
  %v392 = vunpack.c.l.b16 %v89
  %v393 = vunpack.c.l.b16 %v90
  %v394 = vunpack.c.l.b16 %v91
  %v395 = vunpack.c.l.b16 %v92
  %v396 = vunpack.c.l.b16 %v93
  %v397 = vunpack.c.l.b16 %v94
  %v398 = vunpack.c.l.b16 %v95
  %v399 = vunpack.c.l.b16 %v96
  %v400 = vunpack.c.l.b16 %v97
  %v401 = vunpack.c.l.b16 %v98
  %v402 = vunpack.c.l.b16 %v99
  %v403 = vunpack.c.l.b16 %v100
  %v404 = vunpack.c.l.b16 %v101
  %v405 = vunpack.c.l.b16 %v102
  %v406 = vunpack.c.l.b16 %v103
  %v407 = vunpack.c.l.b16 %v104
  %v408 = vunpack.c.l.b16 %v105
  %v409 = vunpack.c.l.b16 %v106
  %v410 = vunpack.c.l.b16 %v107
  %v411 = vunpack.c.l.b16 %v108
  %v412 = vunpack.c.l.b16 %v109
  %v413 = vunpack.c.l.b16 %v110
  %v414 = vunpack.c.l.b16 %v111
  %v415 = vunpack.c.l.b16 %v112
  %v416 = vunpack.c.l.b16 %v113
  %v417 = vunpack.c.l.b16 %v114
  %v418 = vunpack.c.l.b16 %v115
  %v419 = vunpack.c.l.b16 %v116
  %v420 = vunpack.c.l.b16 %v117
  %v421 = vunpack.c.l.b16 %v118
  %v422 = vunpack.c.l.b16 %v119
  %v423 = vunpack.c.l.b16 %v120
  %v424 = vunpack.c.l.b16 %v121
  %v425 = vunpack.c.l.b16 %v122
  %v426 = vunpack.c.l.b16 %v123
  %v427 = vunpack.c.l.b16 %v124
  %v428 = vunpack.c.l.b16 %v125
  %v429 = vunpack.c.l.b16 %v126
  %v430 = vunpack.c.l.b16 %v127
  %v431 = vunpack.c.l.b16 %v128
  %v432 = vunpack.c.l.b16 %v129
  %v433 = vunpack.c.l.b16 %v130
  %v434 = vunpack.c.l.b16 %v131
  %v435 = vunpack.c.l.b16 %v132
  %v436 = vunpack.c.l.b16 %v133
  %v437 = vunpack.c.l.b16 %v134
  %v438 = vunpack.c.l.b16 %v135
  %v439 = vunpack.c.l.b16 %v136
  %v440 = vunpack.c.l.b16 %v137
  %v441 = vunpack.c.l.b16 %v138
  %v442 = vunpack.c.l.b16 %v139
  %v443 = vunpack.c.l.b16 %v140
  %v444 = vunpack.c.l.b16 %v141
  %v445 = vunpack.c.l.b16 %v142
  %v446 = vunpack.c.l.b16 %v143
  %v447 = vunpack.c.l.b16 %v144
  %v448 = vunpack.c.l.b16 %v145
  %v449 = vunpack.c.l.b16 %v146
  %v450 = vunpack.c.l.b16 %v147
  %v451 = vunpack.c.l.b16 %v148
  %v452 = vunpack.c.l.b16 %v149
  %v453 = vunpack.c.l.b16 %v150
  %v454 = vunpack.c.l.b16 %v151
  %v455 = vunpack.c.l.b16 %v152
  %v456 = vunpack.c.l.b16 %v153
  %v457 = vunpack.c.l.b16 %v154
  %v458 = vunpack.c.l.b16 %v155
  %v459 = vunpack.c.l.b16 %v156
  %v460 = vunpack.c.l.b16 %v157
  %v461 = vunpack.c.l.b16 %v158
  %v462 = vunpack.c.l.b16 %v159
  %v463 = vunpack.c.l.b16 %v160
  %v464 = vunpack.c.l.b16 %v161
  %v465 = vunpack.c.l.b16 %v162
  %v466 = vunpack.c.l.b16 %v163
  %v467 = vunpack.c.l.b16 %v164
  %v468 = vunpack.c.l.b16 %v165
  %v469 = vunpack.c.l.b16 %v166
  %v470 = vunpack.c.l.b16 %v167
  %v471 = vunpack.c.l.b16 %v168
  %v472 = vunpack.c.l.b16 %v169
  %v473 = vunpack.c.l.b16 %v170
  %v474 = vunpack.c.l.b16 %v171
  %v475 = vunpack.c.l.b16 %v172
  %v476 = vunpack.c.l.b16 %v173
  %v477 = vunpack.c.l.b16 %v174
  %v478 = vpack.c.b16 %v351, %v350
  %v479 = vpack.c.b16 %v353, %v352
  %v480 = vpack.c.b16 %v355, %v354
  %v481 = vpack.c.b16 %v357, %v356
  %v482 = vpack.c.b16 %v359, %v358
  %v483 = vpack.c.b16 %v361, %v360
  %v484 = vpack.c.b16 %v363, %v362
  %v485 = vpack.c.b16 %v365, %v364
  %v486 = vpack.c.b16 %v367, %v366
  %v487 = vpack.c.b16 %v369, %v368
  %v488 = vpack.c.b16 %v371, %v370
  %v489 = vpack.c.b16 %v373, %v372
  %v490 = vpack.c.b16 %v375, %v374
  %v491 = vpack.c.b16 %v377, %v376
  %v492 = vpack.c.b16 %v379, %v378
  %v493 = vpack.c.b16 %v381, %v380
  %v494 = vpack.c.b16 %v383, %v382
  %v495 = vpack.c.b16 %v385, %v384
  %v496 = vpack.c.b16 %v387, %v386
  %v497 = vpack.c.b16 %v389, %v388
  %v498 = vpack.c.b16 %v391, %v390
  %v499 = vpack.c.b16 %v393, %v392
  %v500 = vpack.c.b16 %v395, %v394
  %v501 = vpack.c.b16 %v397, %v396
  %v502 = vpack.c.b16 %v399, %v398
  %v503 = vpack.c.b16 %v401, %v400
  %v504 = vpack.c.b16 %v403, %v402
  %v505 = vpack.c.b16 %v405, %v404
  %v506 = vpack.c.b16 %v407, %v406
  %v507 = vpack.c.b16 %v409, %v408
  %v508 = vpack.c.b16 %v411, %v410
  %v509 = vpack.c.b16 %v413, %v412
  %v510 = vpack.c.b16 %v415, %v414
  %v511 = vpack.c.b16 %v417, %v416
  %v512 = vpack.c.b16 %v419, %v418
  %v513 = vpack.c.b16 %v421, %v420
  %v514 = vpack.c.b16 %v423, %v422
  %v515 = vpack.c.b16 %v425, %v424
  %v516 = vpack.c.b16 %v427, %v426
  %v517 = vpack.c.b16 %v429, %v428
  %v518 = vpack.c.b16 %v431, %v430
  %v519 = vpack.c.b16 %v433, %v432
  %v520 = vpack.c.b16 %v435, %v434
  %v521 = vpack.c.b16 %v437, %v436
  %v522 = vpack.c.b16 %v439, %v438
  %v523 = vpack.c.b16 %v441, %v440
  %v524 = vpack.c.b16 %v443, %v442
  %v525 = vpack.c.b16 %v445, %v444
  %v526 = vpack.c.b16 %v447, %v446
  %v527 = vpack.c.b16 %v449, %v448
  %v528 = vpack.c.b16 %v451, %v450
  %v529 = vpack.c.b16 %v453, %v452
  %v530 = vpack.c.b16 %v455, %v454
  %v531 = vpack.c.b16 %v457, %v456
  %v532 = vpack.c.b16 %v459, %v458
  %v533 = vpack.c.b16 %v461, %v460
  %v534 = vpack.c.b16 %v463, %v462
  %v535 = vpack.c.b16 %v465, %v464
  %v536 = vpack.c.b16 %v467, %v466
  %v537 = vpack.c.b16 %v469, %v468
  %v538 = vpack.c.b16 %v471, %v470
  %v539 = vpack.c.b16 %v473, %v472
  %v540 = vpack.c.b16 %v475, %v474
  %v541 = vpack.c.b16 %v477, %v476
  %606 = vmatprep.subr.bf16.mxu0 0
  %607 = vmatpush1.bf16.msra.mxu0 %v485
  %608 = vmatprep.subr.bf16.mxu0 0
  %609 = vmatpush1.bf16.msra.mxu0 %v484
  %610 = vmatprep.subr.bf16.mxu0 0
  %611 = vmatpush1.bf16.msra.mxu0 %v483
  %612 = vmatprep.subr.bf16.mxu0 0
  %613 = vmatpush1.bf16.msra.mxu0 %v482
  %614 = vmatprep.subr.bf16.mxu0 0
  %615 = vmatpush1.bf16.msra.mxu0 %v481
  %616 = vmatprep.subr.bf16.mxu0 0
  %617 = vmatpush1.bf16.msra.mxu0 %v480
  %618 = vmatprep.subr.bf16.mxu0 0
  %619 = vmatpush1.bf16.msra.mxu0 %v479
  %620 = vmatprep.subr.bf16.mxu0 0
  %621 = vmatpush1.bf16.msra.mxu0 %v478
  %622 = vmatprep.subr.bf16.mxu0 0
  %623 = vmatpush2.bf16.msra.mxu0 %v493
  %624 = vmatprep.subr.bf16.mxu0 0
  %625 = vmatpush2.bf16.msra.mxu0 %v492
  %626 = vmatprep.subr.bf16.mxu0 0
  %627 = vmatpush2.bf16.msra.mxu0 %v491
  %628 = vmatprep.subr.bf16.mxu0 0
  %629 = vmatpush2.bf16.msra.mxu0 %v490
  %630 = vmatprep.subr.bf16.mxu0 0
  %631 = vmatpush2.bf16.msra.mxu0 %v489
  %632 = vmatprep.subr.bf16.mxu0 0
  %633 = vmatpush2.bf16.msra.mxu0 %v488
  %634 = vmatprep.subr.bf16.mxu0 0
  %635 = vmatpush2.bf16.msra.mxu0 %v487
  %636 = vmatprep.subr.bf16.mxu0 0
  %637 = vmatpush2.bf16.msra.mxu0 %v486
  %638 = vmatprep.mubr.bf16.mxu0 %v207
  %639 = vmatmul.mubr.bf16.gmra.mxu0 %v206
  %v640 = vpop.f32.mrf.mxu0
  %v641 = vadd.f32 %v180, %v640
  %v642 = vpop.f32.mrf.mxu0
  %v643 = vpop.f32.mrf.mxu0
  %v644 = vadd.f32 %v180, %v643
  %v645 = vpop.f32.mrf.mxu0
  %646 = vdwg.mxu0
  %647 = vmatprep.subr.bf16.mxu0 0
  %648 = vmatpush1.bf16.msra.mxu0 %v501
  %649 = vmatprep.subr.bf16.mxu0 0
  %650 = vmatpush1.bf16.msra.mxu0 %v500
  %651 = vmatprep.subr.bf16.mxu0 0
  %652 = vmatpush1.bf16.msra.mxu0 %v499
  %653 = vmatprep.subr.bf16.mxu0 0
  %654 = vmatpush1.bf16.msra.mxu0 %v498
  %655 = vmatprep.subr.bf16.mxu0 0
  %656 = vmatpush1.bf16.msra.mxu0 %v497
  %657 = vmatprep.subr.bf16.mxu0 0
  %658 = vmatpush1.bf16.msra.mxu0 %v496
  %659 = vmatprep.subr.bf16.mxu0 0
  %660 = vmatpush1.bf16.msra.mxu0 %v495
  %661 = vmatprep.subr.bf16.mxu0 0
  %662 = vmatpush1.bf16.msra.mxu0 %v494
  %663 = vmatprep.subr.bf16.mxu0 0
  %664 = vmatpush2.bf16.msra.mxu0 %v509
  %665 = vmatprep.subr.bf16.mxu0 0
  %666 = vmatpush2.bf16.msra.mxu0 %v508
  %667 = vmatprep.subr.bf16.mxu0 0
  %668 = vmatpush2.bf16.msra.mxu0 %v507
  %669 = vmatprep.subr.bf16.mxu0 0
  %670 = vmatpush2.bf16.msra.mxu0 %v506
  %671 = vmatprep.subr.bf16.mxu0 0
  %672 = vmatpush2.bf16.msra.mxu0 %v505
  %673 = vmatprep.subr.bf16.mxu0 0
  %674 = vmatpush2.bf16.msra.mxu0 %v504
  %675 = vmatprep.subr.bf16.mxu0 0
  %676 = vmatpush2.bf16.msra.mxu0 %v503
  %677 = vmatprep.subr.bf16.mxu0 0
  %678 = vmatpush2.bf16.msra.mxu0 %v502
  %679 = vmatprep.mubr.bf16.mxu0 %v209
  %680 = vmatmul.mubr.bf16.gmra.mxu0 %v208
  %v681 = vpop.f32.mrf.mxu0
  %v682 = vadd.f32 %v641, %v681
  %v683 = vpop.f32.mrf.mxu0
  %v684 = vpop.f32.mrf.mxu0
  %v685 = vadd.f32 %v644, %v684
  %v686 = vpop.f32.mrf.mxu0
  %687 = vdwg.mxu0
  %688 = vmatprep.subr.bf16.mxu0 0
  %689 = vmatpush1.bf16.msra.mxu0 %v517
  %690 = vmatprep.subr.bf16.mxu0 0
  %691 = vmatpush1.bf16.msra.mxu0 %v516
  %692 = vmatprep.subr.bf16.mxu0 0
  %693 = vmatpush1.bf16.msra.mxu0 %v515
  %694 = vmatprep.subr.bf16.mxu0 0
  %695 = vmatpush1.bf16.msra.mxu0 %v514
  %696 = vmatprep.subr.bf16.mxu0 0
  %697 = vmatpush1.bf16.msra.mxu0 %v513
  %698 = vmatprep.subr.bf16.mxu0 0
  %699 = vmatpush1.bf16.msra.mxu0 %v512
  %700 = vmatprep.subr.bf16.mxu0 0
  %701 = vmatpush1.bf16.msra.mxu0 %v511
  %702 = vmatprep.subr.bf16.mxu0 0
  %703 = vmatpush1.bf16.msra.mxu0 %v510
  %704 = vmatprep.subr.bf16.mxu0 0
  %705 = vmatpush2.bf16.msra.mxu0 %v525
  %706 = vmatprep.subr.bf16.mxu0 0
  %707 = vmatpush2.bf16.msra.mxu0 %v524
  %708 = vmatprep.subr.bf16.mxu0 0
  %709 = vmatpush2.bf16.msra.mxu0 %v523
  %710 = vmatprep.subr.bf16.mxu0 0
  %711 = vmatpush2.bf16.msra.mxu0 %v522
  %712 = vmatprep.subr.bf16.mxu0 0
  %713 = vmatpush2.bf16.msra.mxu0 %v521
  %714 = vmatprep.subr.bf16.mxu0 0
  %715 = vmatpush2.bf16.msra.mxu0 %v520
  %716 = vmatprep.subr.bf16.mxu0 0
  %717 = vmatpush2.bf16.msra.mxu0 %v519
  %718 = vmatprep.subr.bf16.mxu0 0
  %719 = vmatpush2.bf16.msra.mxu0 %v518
  %720 = vmatprep.mubr.bf16.mxu0 %v211
  %721 = vmatmul.mubr.bf16.gmra.mxu0 %v210
  %v722 = vpop.f32.mrf.mxu0
  %v723 = vadd.f32 %v682, %v722
  %v724 = vpop.f32.mrf.mxu0
  %v725 = vpop.f32.mrf.mxu0
  %v726 = vadd.f32 %v685, %v725
  %v727 = vpop.f32.mrf.mxu0
  %728 = vdwg.mxu0
  %729 = vmatprep.subr.bf16.mxu0 0
  %730 = vmatpush1.bf16.msra.mxu0 %v533
  %731 = vmatprep.subr.bf16.mxu0 0
  %732 = vmatpush1.bf16.msra.mxu0 %v532
  %733 = vmatprep.subr.bf16.mxu0 0
  %734 = vmatpush1.bf16.msra.mxu0 %v531
  %735 = vmatprep.subr.bf16.mxu0 0
  %736 = vmatpush1.bf16.msra.mxu0 %v530
  %737 = vmatprep.subr.bf16.mxu0 0
  %738 = vmatpush1.bf16.msra.mxu0 %v529
  %739 = vmatprep.subr.bf16.mxu0 0
  %740 = vmatpush1.bf16.msra.mxu0 %v528
  %741 = vmatprep.subr.bf16.mxu0 0
  %742 = vmatpush1.bf16.msra.mxu0 %v527
  %743 = vmatprep.subr.bf16.mxu0 0
  %744 = vmatpush1.bf16.msra.mxu0 %v526
  %745 = vmatprep.subr.bf16.mxu0 0
  %746 = vmatpush2.bf16.msra.mxu0 %v541
  %747 = vmatprep.subr.bf16.mxu0 0
  %748 = vmatpush2.bf16.msra.mxu0 %v540
  %749 = vmatprep.subr.bf16.mxu0 0
  %750 = vmatpush2.bf16.msra.mxu0 %v539
  %751 = vmatprep.subr.bf16.mxu0 0
  %752 = vmatpush2.bf16.msra.mxu0 %v538
  %753 = vmatprep.subr.bf16.mxu0 0
  %754 = vmatpush2.bf16.msra.mxu0 %v537
  %755 = vmatprep.subr.bf16.mxu0 0
  %756 = vmatpush2.bf16.msra.mxu0 %v536
  %757 = vmatprep.subr.bf16.mxu0 0
  %758 = vmatpush2.bf16.msra.mxu0 %v535
  %759 = vmatprep.subr.bf16.mxu0 0
  %760 = vmatpush2.bf16.msra.mxu0 %v534
  %761 = vmatprep.mubr.bf16.mxu0 %v213
  %762 = vmatmul.mubr.bf16.gmra.mxu0 %v212
  %v763 = vpop.f32.mrf.mxu0
  %v764 = vadd.f32 %v723, %v763
  %v765 = vpop.f32.mrf.mxu0
  %v766 = vpop.f32.mrf.mxu0
  %v767 = vadd.f32 %v726, %v766
  %v768 = vpop.f32.mrf.mxu0
  %769 = vdwg.mxu0
  %v770 = vpack.c.bf16 %v767, %v764
  %v771 = vld [vmem:[%s4] sm:$0xff]
  %v772 = vld [vmem:[%s4 + $0x8] sm:$0xff]
  %v773 = vld [vmem:[%s4 + $0x10] sm:$0xff]
  %v774 = vld [vmem:[%s4 + $0x18] sm:$0xff]
  %v775 = vld [vmem:[%s4 + $0x20] sm:$0xff]
  %v776 = vld [vmem:[%s4 + $0x28] sm:$0xff]
  %v777 = vld [vmem:[%s4 + $0x30] sm:$0xff]
  %v778 = vld [vmem:[%s4 + $0x38] sm:$0xff]
  %v779 = vld [vmem:[%s4 + $0x40] sm:$0xff]
  %v780 = vld [vmem:[%s4 + $0x48] sm:$0xff]
  %v781 = vld [vmem:[%s4 + $0x50] sm:$0xff]
  %v782 = vld [vmem:[%s4 + $0x58] sm:$0xff]
  %v783 = vld [vmem:[%s4 + $0x60] sm:$0xff]
  %v784 = vld [vmem:[%s4 + $0x68] sm:$0xff]
  %v785 = vld [vmem:[%s4 + $0x70] sm:$0xff]
  %v786 = vld [vmem:[%s4 + $0x78] sm:$0xff]
  %v787 = vld [vmem:[%s4 + $0x80] sm:$0xff]
  %v788 = vld [vmem:[%s4 + $0x88] sm:$0xff]
  %v789 = vld [vmem:[%s4 + $0x90] sm:$0xff]
  %v790 = vld [vmem:[%s4 + $0x98] sm:$0xff]
  %v791 = vld [vmem:[%s4 + $0xa0] sm:$0xff]
  %v792 = vld [vmem:[%s4 + $0xa8] sm:$0xff]
  %v793 = vld [vmem:[%s4 + $0xb0] sm:$0xff]
  %v794 = vld [vmem:[%s4 + $0xb8] sm:$0xff]
  %v795 = vld [vmem:[%s4 + $0xc0] sm:$0xff]
  %v796 = vld [vmem:[%s4 + $0xc8] sm:$0xff]
  %v797 = vld [vmem:[%s4 + $0xd0] sm:$0xff]
  %v798 = vld [vmem:[%s4 + $0xd8] sm:$0xff]
  %v799 = vld [vmem:[%s4 + $0xe0] sm:$0xff]
  %v800 = vld [vmem:[%s4 + $0xe8] sm:$0xff]
  %v801 = vld [vmem:[%s4 + $0xf0] sm:$0xff]
  %v802 = vld [vmem:[%s4 + $0xf8] sm:$0xff]
  %v803 = vld [vmem:[%s5] sm:$0xf]
  %v805 = vlaneseq
  %v806 = vshrl.u32 %v805, 7
  %v807 = vsub.s32 0, %v806
  %v808 = vrot.slane %v803, %v807
  %v809 = vlaneseq
  %v810 = vshrl.u32 %v809, 7
  %v811 = vsub.s32 1, %v810
  %v812 = vrot.slane %v803, %v811
  %v813 = vlaneseq
  %v814 = vshrl.u32 %v813, 7
  %v815 = vsub.s32 2, %v814
  %v816 = vrot.slane %v803, %v815
  %v817 = vlaneseq
  %v818 = vshrl.u32 %v817, 7
  %v819 = vsub.s32 3, %v818
  %v820 = vrot.slane %v803, %v819
  %v857 = vunpack.c.l.b16 %v771
  %v858 = vunpack.c.h.b16 %v771
  %v859 = vunpack.c.l.b16 %v772
  %v860 = vunpack.c.h.b16 %v772
  %v861 = vunpack.c.l.b16 %v773
  %v862 = vunpack.c.h.b16 %v773
  %v863 = vunpack.c.l.b16 %v774
  %v864 = vunpack.c.h.b16 %v774
  %v865 = vunpack.c.l.b16 %v775
  %v866 = vunpack.c.h.b16 %v775
  %v867 = vunpack.c.l.b16 %v776
  %v868 = vunpack.c.h.b16 %v776
  %v869 = vunpack.c.l.b16 %v777
  %v870 = vunpack.c.h.b16 %v777
  %v871 = vunpack.c.l.b16 %v778
  %v872 = vunpack.c.h.b16 %v778
  %v873 = vunpack.c.l.b16 %v779
  %v874 = vunpack.c.h.b16 %v779
  %v875 = vunpack.c.l.b16 %v780
  %v876 = vunpack.c.h.b16 %v780
  %v877 = vunpack.c.l.b16 %v781
  %v878 = vunpack.c.h.b16 %v781
  %v879 = vunpack.c.l.b16 %v782
  %v880 = vunpack.c.h.b16 %v782
  %v881 = vunpack.c.l.b16 %v783
  %v882 = vunpack.c.h.b16 %v783
  %v883 = vunpack.c.l.b16 %v784
  %v884 = vunpack.c.h.b16 %v784
  %v885 = vunpack.c.l.b16 %v785
  %v886 = vunpack.c.h.b16 %v785
  %v887 = vunpack.c.l.b16 %v786
  %v888 = vunpack.c.h.b16 %v786
  %v889 = vunpack.c.l.b16 %v787
  %v890 = vunpack.c.h.b16 %v787
  %v891 = vunpack.c.l.b16 %v788
  %v892 = vunpack.c.h.b16 %v788
  %v893 = vunpack.c.l.b16 %v789
  %v894 = vunpack.c.h.b16 %v789
  %v895 = vunpack.c.l.b16 %v790
  %v896 = vunpack.c.h.b16 %v790
  %v897 = vunpack.c.l.b16 %v791
  %v898 = vunpack.c.h.b16 %v791
  %v899 = vunpack.c.l.b16 %v792
  %v900 = vunpack.c.h.b16 %v792
  %v901 = vunpack.c.l.b16 %v793
  %v902 = vunpack.c.h.b16 %v793
  %v903 = vunpack.c.l.b16 %v794
  %v904 = vunpack.c.h.b16 %v794
  %v905 = vunpack.c.l.b16 %v795
  %v906 = vunpack.c.h.b16 %v795
  %v907 = vunpack.c.l.b16 %v796
  %v908 = vunpack.c.h.b16 %v796
  %v909 = vunpack.c.l.b16 %v797
  %v910 = vunpack.c.h.b16 %v797
  %v911 = vunpack.c.l.b16 %v798
  %v912 = vunpack.c.h.b16 %v798
  %v913 = vunpack.c.l.b16 %v799
  %v914 = vunpack.c.h.b16 %v799
  %v915 = vunpack.c.l.b16 %v800
  %v916 = vunpack.c.h.b16 %v800
  %v917 = vunpack.c.l.b16 %v801
  %v918 = vunpack.c.h.b16 %v801
  %v919 = vunpack.c.l.b16 %v802
  %v920 = vunpack.c.h.b16 %v802
  %v921 = vpack.c.b16 %v861, %v857
  %v922 = vpack.c.b16 %v862, %v858
  %v923 = vpack.c.b16 %v863, %v859
  %v924 = vpack.c.b16 %v864, %v860
  %v925 = vpack.c.b16 %v869, %v865
  %v926 = vpack.c.b16 %v870, %v866
  %v927 = vpack.c.b16 %v871, %v867
  %v928 = vpack.c.b16 %v872, %v868
  %v929 = vpack.c.b16 %v877, %v873
  %v930 = vpack.c.b16 %v878, %v874
  %v931 = vpack.c.b16 %v879, %v875
  %v932 = vpack.c.b16 %v880, %v876
  %v933 = vpack.c.b16 %v885, %v881
  %v934 = vpack.c.b16 %v886, %v882
  %v935 = vpack.c.b16 %v887, %v883
  %v936 = vpack.c.b16 %v888, %v884
  %v937 = vpack.c.b16 %v893, %v889
  %v938 = vpack.c.b16 %v894, %v890
  %v939 = vpack.c.b16 %v895, %v891
  %v940 = vpack.c.b16 %v896, %v892
  %v941 = vpack.c.b16 %v901, %v897
  %v942 = vpack.c.b16 %v902, %v898
  %v943 = vpack.c.b16 %v903, %v899
  %v944 = vpack.c.b16 %v904, %v900
  %v945 = vpack.c.b16 %v909, %v905
  %v946 = vpack.c.b16 %v910, %v906
  %v947 = vpack.c.b16 %v911, %v907
  %v948 = vpack.c.b16 %v912, %v908
  %v949 = vpack.c.b16 %v917, %v913
  %v950 = vpack.c.b16 %v918, %v914
  %v951 = vpack.c.b16 %v919, %v915
  %v952 = vpack.c.b16 %v920, %v916
  %985 = vmatprep.subr.bf16.mxu0 %v950
  %986 = vmatpush1.bf16.msra.mxu0 %v949
  %987 = vmatprep.subr.bf16.mxu0 %v946
  %988 = vmatpush1.bf16.msra.mxu0 %v945
  %989 = vmatprep.subr.bf16.mxu0 %v942
  %990 = vmatpush1.bf16.msra.mxu0 %v941
  %991 = vmatprep.subr.bf16.mxu0 %v938
  %992 = vmatpush1.bf16.msra.mxu0 %v937
  %993 = vmatprep.subr.bf16.mxu0 %v934
  %994 = vmatpush1.bf16.msra.mxu0 %v933
  %995 = vmatprep.subr.bf16.mxu0 %v930
  %996 = vmatpush1.bf16.msra.mxu0 %v929
  %997 = vmatprep.subr.bf16.mxu0 %v926
  %998 = vmatpush1.bf16.msra.mxu0 %v925
  %999 = vmatprep.subr.bf16.mxu0 %v922
  %1000 = vmatpush1.bf16.msra.mxu0 %v921
  %1001 = vmatprep.subr.bf16.mxu0 0
  %1002 = vmatpush2.bf16.msra.mxu0 0
  %1003 = vmatprep.subr.bf16.mxu0 0
  %1004 = vmatpush2.bf16.msra.mxu0 0
  %1005 = vmatprep.subr.bf16.mxu0 0
  %1006 = vmatpush2.bf16.msra.mxu0 0
  %1007 = vmatprep.subr.bf16.mxu0 0
  %1008 = vmatpush2.bf16.msra.mxu0 0
  %1009 = vmatprep.subr.bf16.mxu0 0
  %1010 = vmatpush2.bf16.msra.mxu0 0
  %1011 = vmatprep.subr.bf16.mxu0 0
  %1012 = vmatpush2.bf16.msra.mxu0 0
  %1013 = vmatprep.subr.bf16.mxu0 0
  %1014 = vmatpush2.bf16.msra.mxu0 0
  %1015 = vmatprep.subr.bf16.mxu0 0
  %1016 = vmatpush2.bf16.msra.mxu0 0
  %1017 = vmatprep.mubr.bf16.mxu0 0
  %1018 = vmatmul.mubr.bf16.gmra.mxu0 %v770
  %v1019 = vpop.f32.mrf.mxu0
  %v1020 = vadd.f32 %v808, %v1019
  %v1021 = vpop.f32.mrf.mxu0
  %v1022 = vadd.f32 %v812, %v1021
  %v1023 = vpop.f32.mrf.mxu0
  %v1024 = vadd.f32 %v808, %v1023
  %v1025 = vpop.f32.mrf.mxu0
  %v1026 = vadd.f32 %v812, %v1025
  %1027 = vdwg.mxu0
  %1028 = vmatprep.subr.bf16.mxu0 %v952
  %1029 = vmatpush1.bf16.msra.mxu0 %v951
  %1030 = vmatprep.subr.bf16.mxu0 %v948
  %1031 = vmatpush1.bf16.msra.mxu0 %v947
  %1032 = vmatprep.subr.bf16.mxu0 %v944
  %1033 = vmatpush1.bf16.msra.mxu0 %v943
  %1034 = vmatprep.subr.bf16.mxu0 %v940
  %1035 = vmatpush1.bf16.msra.mxu0 %v939
  %1036 = vmatprep.subr.bf16.mxu0 %v936
  %1037 = vmatpush1.bf16.msra.mxu0 %v935
  %1038 = vmatprep.subr.bf16.mxu0 %v932
  %1039 = vmatpush1.bf16.msra.mxu0 %v931
  %1040 = vmatprep.subr.bf16.mxu0 %v928
  %1041 = vmatpush1.bf16.msra.mxu0 %v927
  %1042 = vmatprep.subr.bf16.mxu0 %v924
  %1043 = vmatpush1.bf16.msra.mxu0 %v923
  %1044 = vmatprep.subr.bf16.mxu0 0
  %1045 = vmatpush2.bf16.msra.mxu0 0
  %1046 = vmatprep.subr.bf16.mxu0 0
  %1047 = vmatpush2.bf16.msra.mxu0 0
  %1048 = vmatprep.subr.bf16.mxu0 0
  %1049 = vmatpush2.bf16.msra.mxu0 0
  %1050 = vmatprep.subr.bf16.mxu0 0
  %1051 = vmatpush2.bf16.msra.mxu0 0
  %1052 = vmatprep.subr.bf16.mxu0 0
  %1053 = vmatpush2.bf16.msra.mxu0 0
  %1054 = vmatprep.subr.bf16.mxu0 0
  %1055 = vmatpush2.bf16.msra.mxu0 0
  %1056 = vmatprep.subr.bf16.mxu0 0
  %1057 = vmatpush2.bf16.msra.mxu0 0
  %1058 = vmatprep.subr.bf16.mxu0 0
  %1059 = vmatpush2.bf16.msra.mxu0 0
  %1060 = vmatprep.mubr.bf16.mxu0 0
  %1061 = vmatmul.mubr.bf16.gmra.mxu0 %v770
  %v1062 = vpop.f32.mrf.mxu0
  %v1063 = vadd.f32 %v816, %v1062
  %v1064 = vpop.f32.mrf.mxu0
  %v1065 = vadd.f32 %v820, %v1064
  %v1066 = vpop.f32.mrf.mxu0
  %v1067 = vadd.f32 %v816, %v1066
  %v1068 = vpop.f32.mrf.mxu0
  %v1069 = vadd.f32 %v820, %v1068
  %1070 = vdwg.mxu0
  %v1071 = vld [vmem:[%s1] sm:$0xff]
  %v1072 = vld [vmem:[%s1 + $0x8] sm:$0xff]
  %1074 = vset.pattern.permute.xlu0 0
  %1075 = vperm.xlu0 %1074, %v1071
  %v1076 = vpop.permute.xlu0 %1075
  %1079 = vset.pattern.permute.xlu0 0
  %1080 = vperm.xlu0 %1079, %v1072
  %v1081 = vpop.permute.xlu0 %1080
  %v1083 = vmul.f32 %v1020, %v1076
  %v1084 = vmul.f32 %v1022, %v1076
  %v1085 = vmul.f32 %v1063, %v1076
  %v1086 = vmul.f32 %v1065, %v1076
  %v1087 = vmul.f32 %v1024, %v1081
  %v1088 = vmul.f32 %v1026, %v1081
  %v1089 = vmul.f32 %v1067, %v1081
  %v1090 = vmul.f32 %v1069, %v1081
  %v1091 = vrot.slane %v1083, 4
  %v1092 = vadd.f32 %v1083, %v1091
  %v1093 = vrot.slane %v1092, 2
  %v1094 = vadd.f32 %v1092, %v1093
  %v1095 = vrot.slane %v1094, 1
  %v1096 = vadd.f32 %v1094, %v1095
  %v1097 = vrot.slane %v1084, 4
  %v1098 = vadd.f32 %v1084, %v1097
  %v1099 = vrot.slane %v1098, 2
  %v1100 = vadd.f32 %v1098, %v1099
  %v1101 = vrot.slane %v1100, 1
  %v1102 = vadd.f32 %v1100, %v1101
  %v1103 = vrot.slane %v1085, 4
  %v1104 = vadd.f32 %v1085, %v1103
  %v1105 = vrot.slane %v1104, 2
  %v1106 = vadd.f32 %v1104, %v1105
  %v1107 = vrot.slane %v1106, 1
  %v1108 = vadd.f32 %v1106, %v1107
  %v1109 = vrot.slane %v1086, 4
  %v1110 = vadd.f32 %v1086, %v1109
  %v1111 = vrot.slane %v1110, 2
  %v1112 = vadd.f32 %v1110, %v1111
  %v1113 = vrot.slane %v1112, 1
  %v1114 = vadd.f32 %v1112, %v1113
  %v1115 = vrot.slane %v1087, 4
  %v1116 = vadd.f32 %v1087, %v1115
  %v1117 = vrot.slane %v1116, 2
  %v1118 = vadd.f32 %v1116, %v1117
  %v1119 = vrot.slane %v1118, 1
  %v1120 = vadd.f32 %v1118, %v1119
  %v1121 = vrot.slane %v1088, 4
  %v1122 = vadd.f32 %v1088, %v1121
  %v1123 = vrot.slane %v1122, 2
  %v1124 = vadd.f32 %v1122, %v1123
  %v1125 = vrot.slane %v1124, 1
  %v1126 = vadd.f32 %v1124, %v1125
  %v1127 = vrot.slane %v1089, 4
  %v1128 = vadd.f32 %v1089, %v1127
  %v1129 = vrot.slane %v1128, 2
  %v1130 = vadd.f32 %v1128, %v1129
  %v1131 = vrot.slane %v1130, 1
  %v1132 = vadd.f32 %v1130, %v1131
  %v1133 = vrot.slane %v1090, 4
  %v1134 = vadd.f32 %v1090, %v1133
  %v1135 = vrot.slane %v1134, 2
  %v1136 = vadd.f32 %v1134, %v1135
  %v1137 = vrot.slane %v1136, 1
  %v1138 = vadd.f32 %v1136, %v1137
  %v1139 = vmul.f32 %v1096, 0.5
  %v1140 = vmul.f32 %v1102, 0.5
  %v1141 = vmul.f32 %v1108, 0.5
  %v1142 = vmul.f32 %v1114, 0.5
  %v1143 = vmul.f32 %v1120, 0.5
  %v1144 = vmul.f32 %v1126, 0.5
  %v1145 = vmul.f32 %v1132, 0.5
  %v1146 = vmul.f32 %v1138, 0.5
  %v1147 = vsub.f32 %v1020, %v1139
  %v1148 = vsub.f32 %v1022, %v1140
  %v1149 = vsub.f32 %v1063, %v1141
  %v1150 = vsub.f32 %v1065, %v1142
  %v1151 = vsub.f32 %v1024, %v1143
  %v1152 = vsub.f32 %v1026, %v1144
  %v1153 = vsub.f32 %v1067, %v1145
  %v1154 = vsub.f32 %v1069, %v1146
  %v1155 = vmul.f32 %v1147, %v1076
  %v1156 = vmul.f32 %v1148, %v1076
  %v1157 = vmul.f32 %v1149, %v1076
  %v1158 = vmul.f32 %v1150, %v1076
  %v1159 = vmul.f32 %v1151, %v1081
  %v1160 = vmul.f32 %v1152, %v1081
  %v1161 = vmul.f32 %v1153, %v1081
  %v1162 = vmul.f32 %v1154, %v1081
  %v1163 = vmul.f32 %v1155, %v1155
  %v1164 = vmul.f32 %v1156, %v1156
  %v1165 = vmul.f32 %v1157, %v1157
  %v1166 = vmul.f32 %v1158, %v1158
  %v1167 = vmul.f32 %v1159, %v1159
  %v1168 = vmul.f32 %v1160, %v1160
  %v1169 = vmul.f32 %v1161, %v1161
  %v1170 = vmul.f32 %v1162, %v1162
  %v1171 = vrot.slane %v1163, 4
  %v1172 = vadd.f32 %v1163, %v1171
  %v1173 = vrot.slane %v1172, 2
  %v1174 = vadd.f32 %v1172, %v1173
  %v1175 = vrot.slane %v1174, 1
  %v1176 = vadd.f32 %v1174, %v1175
  %v1177 = vrot.slane %v1164, 4
  %v1178 = vadd.f32 %v1164, %v1177
  %v1179 = vrot.slane %v1178, 2
  %v1180 = vadd.f32 %v1178, %v1179
  %v1181 = vrot.slane %v1180, 1
  %v1182 = vadd.f32 %v1180, %v1181
  %v1183 = vrot.slane %v1165, 4
  %v1184 = vadd.f32 %v1165, %v1183
  %v1185 = vrot.slane %v1184, 2
  %v1186 = vadd.f32 %v1184, %v1185
  %v1187 = vrot.slane %v1186, 1
  %v1188 = vadd.f32 %v1186, %v1187
  %v1189 = vrot.slane %v1166, 4
  %v1190 = vadd.f32 %v1166, %v1189
  %v1191 = vrot.slane %v1190, 2
  %v1192 = vadd.f32 %v1190, %v1191
  %v1193 = vrot.slane %v1192, 1
  %v1194 = vadd.f32 %v1192, %v1193
  %v1195 = vrot.slane %v1167, 4
  %v1196 = vadd.f32 %v1167, %v1195
  %v1197 = vrot.slane %v1196, 2
  %v1198 = vadd.f32 %v1196, %v1197
  %v1199 = vrot.slane %v1198, 1
  %v1200 = vadd.f32 %v1198, %v1199
  %v1201 = vrot.slane %v1168, 4
  %v1202 = vadd.f32 %v1168, %v1201
  %v1203 = vrot.slane %v1202, 2
  %v1204 = vadd.f32 %v1202, %v1203
  %v1205 = vrot.slane %v1204, 1
  %v1206 = vadd.f32 %v1204, %v1205
  %v1207 = vrot.slane %v1169, 4
  %v1208 = vadd.f32 %v1169, %v1207
  %v1209 = vrot.slane %v1208, 2
  %v1210 = vadd.f32 %v1208, %v1209
  %v1211 = vrot.slane %v1210, 1
  %v1212 = vadd.f32 %v1210, %v1211
  %v1213 = vrot.slane %v1170, 4
  %v1214 = vadd.f32 %v1170, %v1213
  %v1215 = vrot.slane %v1214, 2
  %v1216 = vadd.f32 %v1214, %v1215
  %v1217 = vrot.slane %v1216, 1
  %v1218 = vadd.f32 %v1216, %v1217
  %v1219 = vmul.f32 %v1176, 0.5
  %v1220 = vmul.f32 %v1182, 0.5
  %v1221 = vmul.f32 %v1188, 0.5
  %v1222 = vmul.f32 %v1194, 0.5
  %v1223 = vmul.f32 %v1200, 0.5
  %v1224 = vmul.f32 %v1206, 0.5
  %v1225 = vmul.f32 %v1212, 0.5
  %v1226 = vmul.f32 %v1218, 0.5
  %v1227 = vadd.f32 %v1219, 1e-05
  %v1228 = vadd.f32 %v1220, 1e-05
  %v1229 = vadd.f32 %v1221, 1e-05
  %v1230 = vadd.f32 %v1222, 1e-05
  %v1231 = vadd.f32 %v1223, 1e-05
  %v1232 = vadd.f32 %v1224, 1e-05
  %v1233 = vadd.f32 %v1225, 1e-05
  %v1234 = vadd.f32 %v1226, 1e-05
  %v1235 = vrsqrt.pop %v1227
  %v1236 = vrsqrt.pop %v1228
  %v1237 = vrsqrt.pop %v1229
  %v1238 = vrsqrt.pop %v1230
  %v1239 = vrsqrt.pop %v1231
  %v1240 = vrsqrt.pop %v1232
  %v1241 = vrsqrt.pop %v1233
  %v1242 = vrsqrt.pop %v1234
  %v1243 = vmul.f32 %v1147, %v1235
  %v1244 = vmul.f32 %v1148, %v1236
  %v1245 = vmul.f32 %v1149, %v1237
  %v1246 = vmul.f32 %v1150, %v1238
  %v1247 = vmul.f32 %v1151, %v1239
  %v1248 = vmul.f32 %v1152, %v1240
  %v1249 = vmul.f32 %v1153, %v1241
  %v1250 = vmul.f32 %v1154, %v1242
  %v1251 = vld [vmem:[%s6] sm:$0xf]
  %v1253 = vlaneseq
  %v1254 = vshrl.u32 %v1253, 7
  %v1255 = vsub.s32 0, %v1254
  %v1256 = vrot.slane %v1251, %v1255
  %v1257 = vlaneseq
  %v1258 = vshrl.u32 %v1257, 7
  %v1259 = vsub.s32 1, %v1258
  %v1260 = vrot.slane %v1251, %v1259
  %v1261 = vlaneseq
  %v1262 = vshrl.u32 %v1261, 7
  %v1263 = vsub.s32 2, %v1262
  %v1264 = vrot.slane %v1251, %v1263
  %v1265 = vlaneseq
  %v1266 = vshrl.u32 %v1265, 7
  %v1267 = vsub.s32 3, %v1266
  %v1268 = vrot.slane %v1251, %v1267
  %v1273 = vmul.f32 %v1243, %v1256
  %v1274 = vmul.f32 %v1244, %v1260
  %v1275 = vmul.f32 %v1245, %v1264
  %v1276 = vmul.f32 %v1246, %v1268
  %v1277 = vmul.f32 %v1247, %v1256
  %v1278 = vmul.f32 %v1248, %v1260
  %v1279 = vmul.f32 %v1249, %v1264
  %v1280 = vmul.f32 %v1250, %v1268
  %v1281 = vld [vmem:[%s7] sm:$0xf]
  %v1283 = vlaneseq
  %v1284 = vshrl.u32 %v1283, 7
  %v1285 = vsub.s32 0, %v1284
  %v1286 = vrot.slane %v1281, %v1285
  %v1287 = vlaneseq
  %v1288 = vshrl.u32 %v1287, 7
  %v1289 = vsub.s32 1, %v1288
  %v1290 = vrot.slane %v1281, %v1289
  %v1291 = vlaneseq
  %v1292 = vshrl.u32 %v1291, 7
  %v1293 = vsub.s32 2, %v1292
  %v1294 = vrot.slane %v1281, %v1293
  %v1295 = vlaneseq
  %v1296 = vshrl.u32 %v1295, 7
  %v1297 = vsub.s32 3, %v1296
  %v1298 = vrot.slane %v1281, %v1297
  %v1303 = vadd.f32 %v1273, %v1286
  %v1304 = vadd.f32 %v1274, %v1290
  %v1305 = vadd.f32 %v1275, %v1294
  %v1306 = vadd.f32 %v1276, %v1298
  %v1307 = vadd.f32 %v1277, %v1286
  %v1308 = vadd.f32 %v1278, %v1290
  %v1309 = vadd.f32 %v1279, %v1294
  %v1310 = vadd.f32 %v1280, %v1298
  %v1311 = vmax.f32 %v1303, 0.0
  %v1312 = vmax.f32 %v1304, 0.0
  %v1313 = vmax.f32 %v1305, 0.0
  %v1314 = vmax.f32 %v1306, 0.0
  %v1315 = vmax.f32 %v1307, 0.0
  %v1316 = vmax.f32 %v1308, 0.0
  %v1317 = vmax.f32 %v1309, 0.0
  %v1318 = vmax.f32 %v1310, 0.0
  %v1319 = vpack.c.bf16 %v1315, %v1311
  %v1320 = vpack.c.bf16 %v1316, %v1312
  %v1321 = vpack.c.bf16 %v1317, %v1313
  %v1322 = vpack.c.bf16 %v1318, %v1314
  %v1323 = vld [vmem:[%s8] sm:$0xff]
  %v1324 = vld [vmem:[%s8 + $0x8] sm:$0xff]
  %v1325 = vld [vmem:[%s8 + $0x10] sm:$0xff]
  %v1326 = vld [vmem:[%s8 + $0x18] sm:$0xff]
  %v1327 = vld [vmem:[%s8 + $0x20] sm:$0xff]
  %v1328 = vld [vmem:[%s8 + $0x28] sm:$0xff]
  %v1329 = vld [vmem:[%s8 + $0x30] sm:$0xff]
  %v1330 = vld [vmem:[%s8 + $0x38] sm:$0xff]
  %v1331 = vld [vmem:[%s8 + $0x40] sm:$0xff]
  %v1332 = vld [vmem:[%s8 + $0x48] sm:$0xff]
  %v1333 = vld [vmem:[%s8 + $0x50] sm:$0xff]
  %v1334 = vld [vmem:[%s8 + $0x58] sm:$0xff]
  %v1335 = vld [vmem:[%s8 + $0x60] sm:$0xff]
  %v1336 = vld [vmem:[%s8 + $0x68] sm:$0xff]
  %v1337 = vld [vmem:[%s8 + $0x70] sm:$0xff]
  %v1338 = vld [vmem:[%s8 + $0x78] sm:$0xff]
  %v1339 = vld [vmem:[%s8 + $0x80] sm:$0xff]
  %v1340 = vld [vmem:[%s8 + $0x88] sm:$0xff]
  %v1341 = vld [vmem:[%s8 + $0x90] sm:$0xff]
  %v1342 = vld [vmem:[%s8 + $0x98] sm:$0xff]
  %v1343 = vld [vmem:[%s8 + $0xa0] sm:$0xff]
  %v1344 = vld [vmem:[%s8 + $0xa8] sm:$0xff]
  %v1345 = vld [vmem:[%s8 + $0xb0] sm:$0xff]
  %v1346 = vld [vmem:[%s8 + $0xb8] sm:$0xff]
  %v1347 = vld [vmem:[%s8 + $0xc0] sm:$0xff]
  %v1348 = vld [vmem:[%s8 + $0xc8] sm:$0xff]
  %v1349 = vld [vmem:[%s8 + $0xd0] sm:$0xff]
  %v1350 = vld [vmem:[%s8 + $0xd8] sm:$0xff]
  %v1351 = vld [vmem:[%s8 + $0xe0] sm:$0xff]
  %v1352 = vld [vmem:[%s8 + $0xe8] sm:$0xff]
  %v1353 = vld [vmem:[%s8 + $0xf0] sm:$0xff]
  %v1354 = vld [vmem:[%s8 + $0xf8] sm:$0xff]
  %v1355 = vld [vmem:[%s8 + $0x100] sm:$0xff]
  %v1356 = vld [vmem:[%s8 + $0x108] sm:$0xff]
  %v1357 = vld [vmem:[%s8 + $0x110] sm:$0xff]
  %v1358 = vld [vmem:[%s8 + $0x118] sm:$0xff]
  %v1359 = vld [vmem:[%s8 + $0x120] sm:$0xff]
  %v1360 = vld [vmem:[%s8 + $0x128] sm:$0xff]
  %v1361 = vld [vmem:[%s8 + $0x130] sm:$0xff]
  %v1362 = vld [vmem:[%s8 + $0x138] sm:$0xff]
  %v1363 = vld [vmem:[%s8 + $0x140] sm:$0xff]
  %v1364 = vld [vmem:[%s8 + $0x148] sm:$0xff]
  %v1365 = vld [vmem:[%s8 + $0x150] sm:$0xff]
  %v1366 = vld [vmem:[%s8 + $0x158] sm:$0xff]
  %v1367 = vld [vmem:[%s8 + $0x160] sm:$0xff]
  %v1368 = vld [vmem:[%s8 + $0x168] sm:$0xff]
  %v1369 = vld [vmem:[%s8 + $0x170] sm:$0xff]
  %v1370 = vld [vmem:[%s8 + $0x178] sm:$0xff]
  %v1371 = vld [vmem:[%s8 + $0x180] sm:$0xff]
  %v1372 = vld [vmem:[%s8 + $0x188] sm:$0xff]
  %v1373 = vld [vmem:[%s8 + $0x190] sm:$0xff]
  %v1374 = vld [vmem:[%s8 + $0x198] sm:$0xff]
  %v1375 = vld [vmem:[%s8 + $0x1a0] sm:$0xff]
  %v1376 = vld [vmem:[%s8 + $0x1a8] sm:$0xff]
  %v1377 = vld [vmem:[%s8 + $0x1b0] sm:$0xff]
  %v1378 = vld [vmem:[%s8 + $0x1b8] sm:$0xff]
  %v1379 = vld [vmem:[%s8 + $0x1c0] sm:$0xff]
  %v1380 = vld [vmem:[%s8 + $0x1c8] sm:$0xff]
  %v1381 = vld [vmem:[%s8 + $0x1d0] sm:$0xff]
  %v1382 = vld [vmem:[%s8 + $0x1d8] sm:$0xff]
  %v1383 = vld [vmem:[%s8 + $0x1e0] sm:$0xff]
  %v1384 = vld [vmem:[%s8 + $0x1e8] sm:$0xff]
  %v1385 = vld [vmem:[%s8 + $0x1f0] sm:$0xff]
  %v1386 = vld [vmem:[%s8 + $0x1f8] sm:$0xff]
  %v1387 = vld [vmem:[%s8 + $0x200] sm:$0xff]
  %v1388 = vld [vmem:[%s8 + $0x208] sm:$0xff]
  %v1389 = vld [vmem:[%s8 + $0x210] sm:$0xff]
  %v1390 = vld [vmem:[%s8 + $0x218] sm:$0xff]
  %v1391 = vld [vmem:[%s8 + $0x220] sm:$0xff]
  %v1392 = vld [vmem:[%s8 + $0x228] sm:$0xff]
  %v1393 = vld [vmem:[%s8 + $0x230] sm:$0xff]
  %v1394 = vld [vmem:[%s8 + $0x238] sm:$0xff]
  %v1395 = vld [vmem:[%s8 + $0x240] sm:$0xff]
  %v1396 = vld [vmem:[%s8 + $0x248] sm:$0xff]
  %v1397 = vld [vmem:[%s8 + $0x250] sm:$0xff]
  %v1398 = vld [vmem:[%s8 + $0x258] sm:$0xff]
  %v1399 = vld [vmem:[%s8 + $0x260] sm:$0xff]
  %v1400 = vld [vmem:[%s8 + $0x268] sm:$0xff]
  %v1401 = vld [vmem:[%s8 + $0x270] sm:$0xff]
  %v1402 = vld [vmem:[%s8 + $0x278] sm:$0xff]
  %v1403 = vld [vmem:[%s8 + $0x280] sm:$0xff]
  %v1404 = vld [vmem:[%s8 + $0x288] sm:$0xff]
  %v1405 = vld [vmem:[%s8 + $0x290] sm:$0xff]
  %v1406 = vld [vmem:[%s8 + $0x298] sm:$0xff]
  %v1407 = vld [vmem:[%s8 + $0x2a0] sm:$0xff]
  %v1408 = vld [vmem:[%s8 + $0x2a8] sm:$0xff]
  %v1409 = vld [vmem:[%s8 + $0x2b0] sm:$0xff]
  %v1410 = vld [vmem:[%s8 + $0x2b8] sm:$0xff]
  %v1411 = vld [vmem:[%s8 + $0x2c0] sm:$0xff]
  %v1412 = vld [vmem:[%s8 + $0x2c8] sm:$0xff]
  %v1413 = vld [vmem:[%s8 + $0x2d0] sm:$0xff]
  %v1414 = vld [vmem:[%s8 + $0x2d8] sm:$0xff]
  %v1415 = vld [vmem:[%s8 + $0x2e0] sm:$0xff]
  %v1416 = vld [vmem:[%s8 + $0x2e8] sm:$0xff]
  %v1417 = vld [vmem:[%s8 + $0x2f0] sm:$0xff]
  %v1418 = vld [vmem:[%s8 + $0x2f8] sm:$0xff]
  %v1419 = vld [vmem:[%s8 + $0x300] sm:$0xff]
  %v1420 = vld [vmem:[%s8 + $0x308] sm:$0xff]
  %v1421 = vld [vmem:[%s8 + $0x310] sm:$0xff]
  %v1422 = vld [vmem:[%s8 + $0x318] sm:$0xff]
  %v1423 = vld [vmem:[%s8 + $0x320] sm:$0xff]
  %v1424 = vld [vmem:[%s8 + $0x328] sm:$0xff]
  %v1425 = vld [vmem:[%s8 + $0x330] sm:$0xff]
  %v1426 = vld [vmem:[%s8 + $0x338] sm:$0xff]
  %v1427 = vld [vmem:[%s8 + $0x340] sm:$0xff]
  %v1428 = vld [vmem:[%s8 + $0x348] sm:$0xff]
  %v1429 = vld [vmem:[%s8 + $0x350] sm:$0xff]
  %v1430 = vld [vmem:[%s8 + $0x358] sm:$0xff]
  %v1431 = vld [vmem:[%s8 + $0x360] sm:$0xff]
  %v1432 = vld [vmem:[%s8 + $0x368] sm:$0xff]
  %v1433 = vld [vmem:[%s8 + $0x370] sm:$0xff]
  %v1434 = vld [vmem:[%s8 + $0x378] sm:$0xff]
  %v1435 = vld [vmem:[%s8 + $0x380] sm:$0xff]
  %v1436 = vld [vmem:[%s8 + $0x388] sm:$0xff]
  %v1437 = vld [vmem:[%s8 + $0x390] sm:$0xff]
  %v1438 = vld [vmem:[%s8 + $0x398] sm:$0xff]
  %v1439 = vld [vmem:[%s8 + $0x3a0] sm:$0xff]
  %v1440 = vld [vmem:[%s8 + $0x3a8] sm:$0xff]
  %v1441 = vld [vmem:[%s8 + $0x3b0] sm:$0xff]
  %v1442 = vld [vmem:[%s8 + $0x3b8] sm:$0xff]
  %v1443 = vld [vmem:[%s8 + $0x3c0] sm:$0xff]
  %v1444 = vld [vmem:[%s8 + $0x3c8] sm:$0xff]
  %v1445 = vld [vmem:[%s8 + $0x3d0] sm:$0xff]
  %v1446 = vld [vmem:[%s8 + $0x3d8] sm:$0xff]
  %v1447 = vld [vmem:[%s8 + $0x3e0] sm:$0xff]
  %v1448 = vld [vmem:[%s8 + $0x3e8] sm:$0xff]
  %v1449 = vld [vmem:[%s8 + $0x3f0] sm:$0xff]
  %v1450 = vld [vmem:[%s8 + $0x3f8] sm:$0xff]
  %v1451 = vld [vmem:[%s9] sm:$0xf]
  %v1453 = vlaneseq
  %v1454 = vshrl.u32 %v1453, 7
  %v1455 = vsub.s32 0, %v1454
  %v1456 = vrot.slane %v1451, %v1455
  %v1457 = vlaneseq
  %v1458 = vshrl.u32 %v1457, 7
  %v1459 = vsub.s32 1, %v1458
  %v1460 = vrot.slane %v1451, %v1459
  %v1461 = vlaneseq
  %v1462 = vshrl.u32 %v1461, 7
  %v1463 = vsub.s32 2, %v1462
  %v1464 = vrot.slane %v1451, %v1463
  %v1465 = vlaneseq
  %v1466 = vshrl.u32 %v1465, 7
  %v1467 = vsub.s32 3, %v1466
  %v1468 = vrot.slane %v1451, %v1467
  %v1601 = vunpack.c.l.b16 %v1323
  %v1602 = vunpack.c.h.b16 %v1323
  %v1603 = vunpack.c.l.b16 %v1324
  %v1604 = vunpack.c.h.b16 %v1324
  %v1605 = vunpack.c.l.b16 %v1325
  %v1606 = vunpack.c.h.b16 %v1325
  %v1607 = vunpack.c.l.b16 %v1326
  %v1608 = vunpack.c.h.b16 %v1326
  %v1609 = vunpack.c.l.b16 %v1327
  %v1610 = vunpack.c.h.b16 %v1327
  %v1611 = vunpack.c.l.b16 %v1328
  %v1612 = vunpack.c.h.b16 %v1328
  %v1613 = vunpack.c.l.b16 %v1329
  %v1614 = vunpack.c.h.b16 %v1329
  %v1615 = vunpack.c.l.b16 %v1330
  %v1616 = vunpack.c.h.b16 %v1330
  %v1617 = vunpack.c.l.b16 %v1331
  %v1618 = vunpack.c.h.b16 %v1331
  %v1619 = vunpack.c.l.b16 %v1332
  %v1620 = vunpack.c.h.b16 %v1332
  %v1621 = vunpack.c.l.b16 %v1333
  %v1622 = vunpack.c.h.b16 %v1333
  %v1623 = vunpack.c.l.b16 %v1334
  %v1624 = vunpack.c.h.b16 %v1334
  %v1625 = vunpack.c.l.b16 %v1335
  %v1626 = vunpack.c.h.b16 %v1335
  %v1627 = vunpack.c.l.b16 %v1336
  %v1628 = vunpack.c.h.b16 %v1336
  %v1629 = vunpack.c.l.b16 %v1337
  %v1630 = vunpack.c.h.b16 %v1337
  %v1631 = vunpack.c.l.b16 %v1338
  %v1632 = vunpack.c.h.b16 %v1338
  %v1633 = vunpack.c.l.b16 %v1339
  %v1634 = vunpack.c.h.b16 %v1339
  %v1635 = vunpack.c.l.b16 %v1340
  %v1636 = vunpack.c.h.b16 %v1340
  %v1637 = vunpack.c.l.b16 %v1341
  %v1638 = vunpack.c.h.b16 %v1341
  %v1639 = vunpack.c.l.b16 %v1342
  %v1640 = vunpack.c.h.b16 %v1342
  %v1641 = vunpack.c.l.b16 %v1343
  %v1642 = vunpack.c.h.b16 %v1343
  %v1643 = vunpack.c.l.b16 %v1344
  %v1644 = vunpack.c.h.b16 %v1344
  %v1645 = vunpack.c.l.b16 %v1345
  %v1646 = vunpack.c.h.b16 %v1345
  %v1647 = vunpack.c.l.b16 %v1346
  %v1648 = vunpack.c.h.b16 %v1346
  %v1649 = vunpack.c.l.b16 %v1347
  %v1650 = vunpack.c.h.b16 %v1347
  %v1651 = vunpack.c.l.b16 %v1348
  %v1652 = vunpack.c.h.b16 %v1348
  %v1653 = vunpack.c.l.b16 %v1349
  %v1654 = vunpack.c.h.b16 %v1349
  %v1655 = vunpack.c.l.b16 %v1350
  %v1656 = vunpack.c.h.b16 %v1350
  %v1657 = vunpack.c.l.b16 %v1351
  %v1658 = vunpack.c.h.b16 %v1351
  %v1659 = vunpack.c.l.b16 %v1352
  %v1660 = vunpack.c.h.b16 %v1352
  %v1661 = vunpack.c.l.b16 %v1353
  %v1662 = vunpack.c.h.b16 %v1353
  %v1663 = vunpack.c.l.b16 %v1354
  %v1664 = vunpack.c.h.b16 %v1354
  %v1665 = vunpack.c.l.b16 %v1355
  %v1666 = vunpack.c.h.b16 %v1355
  %v1667 = vunpack.c.l.b16 %v1356
  %v1668 = vunpack.c.h.b16 %v1356
  %v1669 = vunpack.c.l.b16 %v1357
  %v1670 = vunpack.c.h.b16 %v1357
  %v1671 = vunpack.c.l.b16 %v1358
  %v1672 = vunpack.c.h.b16 %v1358
  %v1673 = vunpack.c.l.b16 %v1359
  %v1674 = vunpack.c.h.b16 %v1359
  %v1675 = vunpack.c.l.b16 %v1360
  %v1676 = vunpack.c.h.b16 %v1360
  %v1677 = vunpack.c.l.b16 %v1361
  %v1678 = vunpack.c.h.b16 %v1361
  %v1679 = vunpack.c.l.b16 %v1362
  %v1680 = vunpack.c.h.b16 %v1362
  %v1681 = vunpack.c.l.b16 %v1363
  %v1682 = vunpack.c.h.b16 %v1363
  %v1683 = vunpack.c.l.b16 %v1364
  %v1684 = vunpack.c.h.b16 %v1364
  %v1685 = vunpack.c.l.b16 %v1365
  %v1686 = vunpack.c.h.b16 %v1365
  %v1687 = vunpack.c.l.b16 %v1366
  %v1688 = vunpack.c.h.b16 %v1366
  %v1689 = vunpack.c.l.b16 %v1367
  %v1690 = vunpack.c.h.b16 %v1367
  %v1691 = vunpack.c.l.b16 %v1368
  %v1692 = vunpack.c.h.b16 %v1368
  %v1693 = vunpack.c.l.b16 %v1369
  %v1694 = vunpack.c.h.b16 %v1369
  %v1695 = vunpack.c.l.b16 %v1370
  %v1696 = vunpack.c.h.b16 %v1370
  %v1697 = vunpack.c.l.b16 %v1371
  %v1698 = vunpack.c.h.b16 %v1371
  %v1699 = vunpack.c.l.b16 %v1372
  %v1700 = vunpack.c.h.b16 %v1372
  %v1701 = vunpack.c.l.b16 %v1373
  %v1702 = vunpack.c.h.b16 %v1373
  %v1703 = vunpack.c.l.b16 %v1374
  %v1704 = vunpack.c.h.b16 %v1374
  %v1705 = vunpack.c.l.b16 %v1375
  %v1706 = vunpack.c.h.b16 %v1375
  %v1707 = vunpack.c.l.b16 %v1376
  %v1708 = vunpack.c.h.b16 %v1376
  %v1709 = vunpack.c.l.b16 %v1377
  %v1710 = vunpack.c.h.b16 %v1377
  %v1711 = vunpack.c.l.b16 %v1378
  %v1712 = vunpack.c.h.b16 %v1378
  %v1713 = vunpack.c.l.b16 %v1379
  %v1714 = vunpack.c.h.b16 %v1379
  %v1715 = vunpack.c.l.b16 %v1380
  %v1716 = vunpack.c.h.b16 %v1380
  %v1717 = vunpack.c.l.b16 %v1381
  %v1718 = vunpack.c.h.b16 %v1381
  %v1719 = vunpack.c.l.b16 %v1382
  %v1720 = vunpack.c.h.b16 %v1382
  %v1721 = vunpack.c.l.b16 %v1383
  %v1722 = vunpack.c.h.b16 %v1383
  %v1723 = vunpack.c.l.b16 %v1384
  %v1724 = vunpack.c.h.b16 %v1384
  %v1725 = vunpack.c.l.b16 %v1385
  %v1726 = vunpack.c.h.b16 %v1385
  %v1727 = vunpack.c.l.b16 %v1386
  %v1728 = vunpack.c.h.b16 %v1386
  %v1729 = vunpack.c.l.b16 %v1387
  %v1730 = vunpack.c.h.b16 %v1387
  %v1731 = vunpack.c.l.b16 %v1388
  %v1732 = vunpack.c.h.b16 %v1388
  %v1733 = vunpack.c.l.b16 %v1389
  %v1734 = vunpack.c.h.b16 %v1389
  %v1735 = vunpack.c.l.b16 %v1390
  %v1736 = vunpack.c.h.b16 %v1390
  %v1737 = vunpack.c.l.b16 %v1391
  %v1738 = vunpack.c.h.b16 %v1391
  %v1739 = vunpack.c.l.b16 %v1392
  %v1740 = vunpack.c.h.b16 %v1392
  %v1741 = vunpack.c.l.b16 %v1393
  %v1742 = vunpack.c.h.b16 %v1393
  %v1743 = vunpack.c.l.b16 %v1394
  %v1744 = vunpack.c.h.b16 %v1394
  %v1745 = vunpack.c.l.b16 %v1395
  %v1746 = vunpack.c.h.b16 %v1395
  %v1747 = vunpack.c.l.b16 %v1396
  %v1748 = vunpack.c.h.b16 %v1396
  %v1749 = vunpack.c.l.b16 %v1397
  %v1750 = vunpack.c.h.b16 %v1397
  %v1751 = vunpack.c.l.b16 %v1398
  %v1752 = vunpack.c.h.b16 %v1398
  %v1753 = vunpack.c.l.b16 %v1399
  %v1754 = vunpack.c.h.b16 %v1399
  %v1755 = vunpack.c.l.b16 %v1400
  %v1756 = vunpack.c.h.b16 %v1400
  %v1757 = vunpack.c.l.b16 %v1401
  %v1758 = vunpack.c.h.b16 %v1401
  %v1759 = vunpack.c.l.b16 %v1402
  %v1760 = vunpack.c.h.b16 %v1402
  %v1761 = vunpack.c.l.b16 %v1403
  %v1762 = vunpack.c.h.b16 %v1403
  %v1763 = vunpack.c.l.b16 %v1404
  %v1764 = vunpack.c.h.b16 %v1404
  %v1765 = vunpack.c.l.b16 %v1405
  %v1766 = vunpack.c.h.b16 %v1405
  %v1767 = vunpack.c.l.b16 %v1406
  %v1768 = vunpack.c.h.b16 %v1406
  %v1769 = vunpack.c.l.b16 %v1407
  %v1770 = vunpack.c.h.b16 %v1407
  %v1771 = vunpack.c.l.b16 %v1408
  %v1772 = vunpack.c.h.b16 %v1408
  %v1773 = vunpack.c.l.b16 %v1409
  %v1774 = vunpack.c.h.b16 %v1409
  %v1775 = vunpack.c.l.b16 %v1410
  %v1776 = vunpack.c.h.b16 %v1410
  %v1777 = vunpack.c.l.b16 %v1411
  %v1778 = vunpack.c.h.b16 %v1411
  %v1779 = vunpack.c.l.b16 %v1412
  %v1780 = vunpack.c.h.b16 %v1412
  %v1781 = vunpack.c.l.b16 %v1413
  %v1782 = vunpack.c.h.b16 %v1413
  %v1783 = vunpack.c.l.b16 %v1414
  %v1784 = vunpack.c.h.b16 %v1414
  %v1785 = vunpack.c.l.b16 %v1415
  %v1786 = vunpack.c.h.b16 %v1415
  %v1787 = vunpack.c.l.b16 %v1416
  %v1788 = vunpack.c.h.b16 %v1416
  %v1789 = vunpack.c.l.b16 %v1417
  %v1790 = vunpack.c.h.b16 %v1417
  %v1791 = vunpack.c.l.b16 %v1418
  %v1792 = vunpack.c.h.b16 %v1418
  %v1793 = vunpack.c.l.b16 %v1419
  %v1794 = vunpack.c.h.b16 %v1419
  %v1795 = vunpack.c.l.b16 %v1420
  %v1796 = vunpack.c.h.b16 %v1420
  %v1797 = vunpack.c.l.b16 %v1421
  %v1798 = vunpack.c.h.b16 %v1421
  %v1799 = vunpack.c.l.b16 %v1422
  %v1800 = vunpack.c.h.b16 %v1422
  %v1801 = vunpack.c.l.b16 %v1423
  %v1802 = vunpack.c.h.b16 %v1423
  %v1803 = vunpack.c.l.b16 %v1424
  %v1804 = vunpack.c.h.b16 %v1424
  %v1805 = vunpack.c.l.b16 %v1425
  %v1806 = vunpack.c.h.b16 %v1425
  %v1807 = vunpack.c.l.b16 %v1426
  %v1808 = vunpack.c.h.b16 %v1426
  %v1809 = vunpack.c.l.b16 %v1427
  %v1810 = vunpack.c.h.b16 %v1427
  %v1811 = vunpack.c.l.b16 %v1428
  %v1812 = vunpack.c.h.b16 %v1428
  %v1813 = vunpack.c.l.b16 %v1429
  %v1814 = vunpack.c.h.b16 %v1429
  %v1815 = vunpack.c.l.b16 %v1430
  %v1816 = vunpack.c.h.b16 %v1430
  %v1817 = vunpack.c.l.b16 %v1431
  %v1818 = vunpack.c.h.b16 %v1431
  %v1819 = vunpack.c.l.b16 %v1432
  %v1820 = vunpack.c.h.b16 %v1432
  %v1821 = vunpack.c.l.b16 %v1433
  %v1822 = vunpack.c.h.b16 %v1433
  %v1823 = vunpack.c.l.b16 %v1434
  %v1824 = vunpack.c.h.b16 %v1434
  %v1825 = vunpack.c.l.b16 %v1435
  %v1826 = vunpack.c.h.b16 %v1435
  %v1827 = vunpack.c.l.b16 %v1436
  %v1828 = vunpack.c.h.b16 %v1436
  %v1829 = vunpack.c.l.b16 %v1437
  %v1830 = vunpack.c.h.b16 %v1437
  %v1831 = vunpack.c.l.b16 %v1438
  %v1832 = vunpack.c.h.b16 %v1438
  %v1833 = vunpack.c.l.b16 %v1439
  %v1834 = vunpack.c.h.b16 %v1439
  %v1835 = vunpack.c.l.b16 %v1440
  %v1836 = vunpack.c.h.b16 %v1440
  %v1837 = vunpack.c.l.b16 %v1441
  %v1838 = vunpack.c.h.b16 %v1441
  %v1839 = vunpack.c.l.b16 %v1442
  %v1840 = vunpack.c.h.b16 %v1442
  %v1841 = vunpack.c.l.b16 %v1443
  %v1842 = vunpack.c.h.b16 %v1443
  %v1843 = vunpack.c.l.b16 %v1444
  %v1844 = vunpack.c.h.b16 %v1444
  %v1845 = vunpack.c.l.b16 %v1445
  %v1846 = vunpack.c.h.b16 %v1445
  %v1847 = vunpack.c.l.b16 %v1446
  %v1848 = vunpack.c.h.b16 %v1446
  %v1849 = vunpack.c.l.b16 %v1447
  %v1850 = vunpack.c.h.b16 %v1447
  %v1851 = vunpack.c.l.b16 %v1448
  %v1852 = vunpack.c.h.b16 %v1448
  %v1853 = vunpack.c.l.b16 %v1449
  %v1854 = vunpack.c.h.b16 %v1449
  %v1855 = vunpack.c.l.b16 %v1450
  %v1856 = vunpack.c.h.b16 %v1450
  %v1857 = vpack.c.b16 %v1605, %v1601
  %v1858 = vpack.c.b16 %v1606, %v1602
  %v1859 = vpack.c.b16 %v1607, %v1603
  %v1860 = vpack.c.b16 %v1608, %v1604
  %v1861 = vpack.c.b16 %v1613, %v1609
  %v1862 = vpack.c.b16 %v1614, %v1610
  %v1863 = vpack.c.b16 %v1615, %v1611
  %v1864 = vpack.c.b16 %v1616, %v1612
  %v1865 = vpack.c.b16 %v1621, %v1617
  %v1866 = vpack.c.b16 %v1622, %v1618
  %v1867 = vpack.c.b16 %v1623, %v1619
  %v1868 = vpack.c.b16 %v1624, %v1620
  %v1869 = vpack.c.b16 %v1629, %v1625
  %v1870 = vpack.c.b16 %v1630, %v1626
  %v1871 = vpack.c.b16 %v1631, %v1627
  %v1872 = vpack.c.b16 %v1632, %v1628
  %v1873 = vpack.c.b16 %v1637, %v1633
  %v1874 = vpack.c.b16 %v1638, %v1634
  %v1875 = vpack.c.b16 %v1639, %v1635
  %v1876 = vpack.c.b16 %v1640, %v1636
  %v1877 = vpack.c.b16 %v1645, %v1641
  %v1878 = vpack.c.b16 %v1646, %v1642
  %v1879 = vpack.c.b16 %v1647, %v1643
  %v1880 = vpack.c.b16 %v1648, %v1644
  %v1881 = vpack.c.b16 %v1653, %v1649
  %v1882 = vpack.c.b16 %v1654, %v1650
  %v1883 = vpack.c.b16 %v1655, %v1651
  %v1884 = vpack.c.b16 %v1656, %v1652
  %v1885 = vpack.c.b16 %v1661, %v1657
  %v1886 = vpack.c.b16 %v1662, %v1658
  %v1887 = vpack.c.b16 %v1663, %v1659
  %v1888 = vpack.c.b16 %v1664, %v1660
  %v1889 = vpack.c.b16 %v1669, %v1665
  %v1890 = vpack.c.b16 %v1670, %v1666
  %v1891 = vpack.c.b16 %v1671, %v1667
  %v1892 = vpack.c.b16 %v1672, %v1668
  %v1893 = vpack.c.b16 %v1677, %v1673
  %v1894 = vpack.c.b16 %v1678, %v1674
  %v1895 = vpack.c.b16 %v1679, %v1675
  %v1896 = vpack.c.b16 %v1680, %v1676
  %v1897 = vpack.c.b16 %v1685, %v1681
  %v1898 = vpack.c.b16 %v1686, %v1682
  %v1899 = vpack.c.b16 %v1687, %v1683
  %v1900 = vpack.c.b16 %v1688, %v1684
  %v1901 = vpack.c.b16 %v1693, %v1689
  %v1902 = vpack.c.b16 %v1694, %v1690
  %v1903 = vpack.c.b16 %v1695, %v1691
  %v1904 = vpack.c.b16 %v1696, %v1692
  %v1905 = vpack.c.b16 %v1701, %v1697
  %v1906 = vpack.c.b16 %v1702, %v1698
  %v1907 = vpack.c.b16 %v1703, %v1699
  %v1908 = vpack.c.b16 %v1704, %v1700
  %v1909 = vpack.c.b16 %v1709, %v1705
  %v1910 = vpack.c.b16 %v1710, %v1706
  %v1911 = vpack.c.b16 %v1711, %v1707
  %v1912 = vpack.c.b16 %v1712, %v1708
  %v1913 = vpack.c.b16 %v1717, %v1713
  %v1914 = vpack.c.b16 %v1718, %v1714
  %v1915 = vpack.c.b16 %v1719, %v1715
  %v1916 = vpack.c.b16 %v1720, %v1716
  %v1917 = vpack.c.b16 %v1725, %v1721
  %v1918 = vpack.c.b16 %v1726, %v1722
  %v1919 = vpack.c.b16 %v1727, %v1723
  %v1920 = vpack.c.b16 %v1728, %v1724
  %v1921 = vpack.c.b16 %v1733, %v1729
  %v1922 = vpack.c.b16 %v1734, %v1730
  %v1923 = vpack.c.b16 %v1735, %v1731
  %v1924 = vpack.c.b16 %v1736, %v1732
  %v1925 = vpack.c.b16 %v1741, %v1737
  %v1926 = vpack.c.b16 %v1742, %v1738
  %v1927 = vpack.c.b16 %v1743, %v1739
  %v1928 = vpack.c.b16 %v1744, %v1740
  %v1929 = vpack.c.b16 %v1749, %v1745
  %v1930 = vpack.c.b16 %v1750, %v1746
  %v1931 = vpack.c.b16 %v1751, %v1747
  %v1932 = vpack.c.b16 %v1752, %v1748
  %v1933 = vpack.c.b16 %v1757, %v1753
  %v1934 = vpack.c.b16 %v1758, %v1754
  %v1935 = vpack.c.b16 %v1759, %v1755
  %v1936 = vpack.c.b16 %v1760, %v1756
  %v1937 = vpack.c.b16 %v1765, %v1761
  %v1938 = vpack.c.b16 %v1766, %v1762
  %v1939 = vpack.c.b16 %v1767, %v1763
  %v1940 = vpack.c.b16 %v1768, %v1764
  %v1941 = vpack.c.b16 %v1773, %v1769
  %v1942 = vpack.c.b16 %v1774, %v1770
  %v1943 = vpack.c.b16 %v1775, %v1771
  %v1944 = vpack.c.b16 %v1776, %v1772
  %v1945 = vpack.c.b16 %v1781, %v1777
  %v1946 = vpack.c.b16 %v1782, %v1778
  %v1947 = vpack.c.b16 %v1783, %v1779
  %v1948 = vpack.c.b16 %v1784, %v1780
  %v1949 = vpack.c.b16 %v1789, %v1785
  %v1950 = vpack.c.b16 %v1790, %v1786
  %v1951 = vpack.c.b16 %v1791, %v1787
  %v1952 = vpack.c.b16 %v1792, %v1788
  %v1953 = vpack.c.b16 %v1797, %v1793
  %v1954 = vpack.c.b16 %v1798, %v1794
  %v1955 = vpack.c.b16 %v1799, %v1795
  %v1956 = vpack.c.b16 %v1800, %v1796
  %v1957 = vpack.c.b16 %v1805, %v1801
  %v1958 = vpack.c.b16 %v1806, %v1802
  %v1959 = vpack.c.b16 %v1807, %v1803
  %v1960 = vpack.c.b16 %v1808, %v1804
  %v1961 = vpack.c.b16 %v1813, %v1809
  %v1962 = vpack.c.b16 %v1814, %v1810
  %v1963 = vpack.c.b16 %v1815, %v1811
  %v1964 = vpack.c.b16 %v1816, %v1812
  %v1965 = vpack.c.b16 %v1821, %v1817
  %v1966 = vpack.c.b16 %v1822, %v1818
  %v1967 = vpack.c.b16 %v1823, %v1819
  %v1968 = vpack.c.b16 %v1824, %v1820
  %v1969 = vpack.c.b16 %v1829, %v1825
  %v1970 = vpack.c.b16 %v1830, %v1826
  %v1971 = vpack.c.b16 %v1831, %v1827
  %v1972 = vpack.c.b16 %v1832, %v1828
  %v1973 = vpack.c.b16 %v1837, %v1833
  %v1974 = vpack.c.b16 %v1838, %v1834
  %v1975 = vpack.c.b16 %v1839, %v1835
  %v1976 = vpack.c.b16 %v1840, %v1836
  %v1977 = vpack.c.b16 %v1845, %v1841
  %v1978 = vpack.c.b16 %v1846, %v1842
  %v1979 = vpack.c.b16 %v1847, %v1843
  %v1980 = vpack.c.b16 %v1848, %v1844
  %v1981 = vpack.c.b16 %v1853, %v1849
  %v1982 = vpack.c.b16 %v1854, %v1850
  %v1983 = vpack.c.b16 %v1855, %v1851
  %v1984 = vpack.c.b16 %v1856, %v1852
  %2113 = vmatprep.subr.bf16.mxu0 %v1886
  %2114 = vmatpush1.bf16.msra.mxu0 %v1885
  %2115 = vmatprep.subr.bf16.mxu0 %v1882
  %2116 = vmatpush1.bf16.msra.mxu0 %v1881
  %2117 = vmatprep.subr.bf16.mxu0 %v1878
  %2118 = vmatpush1.bf16.msra.mxu0 %v1877
  %2119 = vmatprep.subr.bf16.mxu0 %v1874
  %2120 = vmatpush1.bf16.msra.mxu0 %v1873
  %2121 = vmatprep.subr.bf16.mxu0 %v1870
  %2122 = vmatpush1.bf16.msra.mxu0 %v1869
  %2123 = vmatprep.subr.bf16.mxu0 %v1866
  %2124 = vmatpush1.bf16.msra.mxu0 %v1865
  %2125 = vmatprep.subr.bf16.mxu0 %v1862
  %2126 = vmatpush1.bf16.msra.mxu0 %v1861
  %2127 = vmatprep.subr.bf16.mxu0 %v1858
  %2128 = vmatpush1.bf16.msra.mxu0 %v1857
  %2129 = vmatprep.subr.bf16.mxu0 %v1918
  %2130 = vmatpush2.bf16.msra.mxu0 %v1917
  %2131 = vmatprep.subr.bf16.mxu0 %v1914
  %2132 = vmatpush2.bf16.msra.mxu0 %v1913
  %2133 = vmatprep.subr.bf16.mxu0 %v1910
  %2134 = vmatpush2.bf16.msra.mxu0 %v1909
  %2135 = vmatprep.subr.bf16.mxu0 %v1906
  %2136 = vmatpush2.bf16.msra.mxu0 %v1905
  %2137 = vmatprep.subr.bf16.mxu0 %v1902
  %2138 = vmatpush2.bf16.msra.mxu0 %v1901
  %2139 = vmatprep.subr.bf16.mxu0 %v1898
  %2140 = vmatpush2.bf16.msra.mxu0 %v1897
  %2141 = vmatprep.subr.bf16.mxu0 %v1894
  %2142 = vmatpush2.bf16.msra.mxu0 %v1893
  %2143 = vmatprep.subr.bf16.mxu0 %v1890
  %2144 = vmatpush2.bf16.msra.mxu0 %v1889
  %2145 = vmatprep.mubr.bf16.mxu0 %v1320
  %2146 = vmatmul.mubr.bf16.gmra.mxu0 %v1319
  %v2147 = vpop.f32.mrf.mxu0
  %v2148 = vadd.f32 %v1456, %v2147
  %v2149 = vpop.f32.mrf.mxu0
  %v2150 = vadd.f32 %v1460, %v2149
  %v2151 = vpop.f32.mrf.mxu0
  %v2152 = vadd.f32 %v1456, %v2151
  %v2153 = vpop.f32.mrf.mxu0
  %v2154 = vadd.f32 %v1460, %v2153
  %2155 = vdwg.mxu0
  %2156 = vmatprep.subr.bf16.mxu0 %v1950
  %2157 = vmatpush1.bf16.msra.mxu0 %v1949
  %2158 = vmatprep.subr.bf16.mxu0 %v1946
  %2159 = vmatpush1.bf16.msra.mxu0 %v1945
  %2160 = vmatprep.subr.bf16.mxu0 %v1942
  %2161 = vmatpush1.bf16.msra.mxu0 %v1941
  %2162 = vmatprep.subr.bf16.mxu0 %v1938
  %2163 = vmatpush1.bf16.msra.mxu0 %v1937
  %2164 = vmatprep.subr.bf16.mxu0 %v1934
  %2165 = vmatpush1.bf16.msra.mxu0 %v1933
  %2166 = vmatprep.subr.bf16.mxu0 %v1930
  %2167 = vmatpush1.bf16.msra.mxu0 %v1929
  %2168 = vmatprep.subr.bf16.mxu0 %v1926
  %2169 = vmatpush1.bf16.msra.mxu0 %v1925
  %2170 = vmatprep.subr.bf16.mxu0 %v1922
  %2171 = vmatpush1.bf16.msra.mxu0 %v1921
  %2172 = vmatprep.subr.bf16.mxu0 %v1982
  %2173 = vmatpush2.bf16.msra.mxu0 %v1981
  %2174 = vmatprep.subr.bf16.mxu0 %v1978
  %2175 = vmatpush2.bf16.msra.mxu0 %v1977
  %2176 = vmatprep.subr.bf16.mxu0 %v1974
  %2177 = vmatpush2.bf16.msra.mxu0 %v1973
  %2178 = vmatprep.subr.bf16.mxu0 %v1970
  %2179 = vmatpush2.bf16.msra.mxu0 %v1969
  %2180 = vmatprep.subr.bf16.mxu0 %v1966
  %2181 = vmatpush2.bf16.msra.mxu0 %v1965
  %2182 = vmatprep.subr.bf16.mxu0 %v1962
  %2183 = vmatpush2.bf16.msra.mxu0 %v1961
  %2184 = vmatprep.subr.bf16.mxu0 %v1958
  %2185 = vmatpush2.bf16.msra.mxu0 %v1957
  %2186 = vmatprep.subr.bf16.mxu0 %v1954
  %2187 = vmatpush2.bf16.msra.mxu0 %v1953
  %2188 = vmatprep.mubr.bf16.mxu0 %v1322
  %2189 = vmatmul.mubr.bf16.gmra.mxu0 %v1321
  %v2190 = vpop.f32.mrf.mxu0
  %v2191 = vadd.f32 %v2148, %v2190
  %v2192 = vpop.f32.mrf.mxu0
  %v2193 = vadd.f32 %v2150, %v2192
  %v2194 = vpop.f32.mrf.mxu0
  %v2195 = vadd.f32 %v2152, %v2194
  %v2196 = vpop.f32.mrf.mxu0
  %v2197 = vadd.f32 %v2154, %v2196
  %2198 = vdwg.mxu0
  %2199 = vmatprep.subr.bf16.mxu0 %v1888
  %2200 = vmatpush1.bf16.msra.mxu0 %v1887
  %2201 = vmatprep.subr.bf16.mxu0 %v1884
  %2202 = vmatpush1.bf16.msra.mxu0 %v1883
  %2203 = vmatprep.subr.bf16.mxu0 %v1880
  %2204 = vmatpush1.bf16.msra.mxu0 %v1879
  %2205 = vmatprep.subr.bf16.mxu0 %v1876
  %2206 = vmatpush1.bf16.msra.mxu0 %v1875
  %2207 = vmatprep.subr.bf16.mxu0 %v1872
  %2208 = vmatpush1.bf16.msra.mxu0 %v1871
  %2209 = vmatprep.subr.bf16.mxu0 %v1868
  %2210 = vmatpush1.bf16.msra.mxu0 %v1867
  %2211 = vmatprep.subr.bf16.mxu0 %v1864
  %2212 = vmatpush1.bf16.msra.mxu0 %v1863
  %2213 = vmatprep.subr.bf16.mxu0 %v1860
  %2214 = vmatpush1.bf16.msra.mxu0 %v1859
  %2215 = vmatprep.subr.bf16.mxu0 %v1920
  %2216 = vmatpush2.bf16.msra.mxu0 %v1919
  %2217 = vmatprep.subr.bf16.mxu0 %v1916
  %2218 = vmatpush2.bf16.msra.mxu0 %v1915
  %2219 = vmatprep.subr.bf16.mxu0 %v1912
  %2220 = vmatpush2.bf16.msra.mxu0 %v1911
  %2221 = vmatprep.subr.bf16.mxu0 %v1908
  %2222 = vmatpush2.bf16.msra.mxu0 %v1907
  %2223 = vmatprep.subr.bf16.mxu0 %v1904
  %2224 = vmatpush2.bf16.msra.mxu0 %v1903
  %2225 = vmatprep.subr.bf16.mxu0 %v1900
  %2226 = vmatpush2.bf16.msra.mxu0 %v1899
  %2227 = vmatprep.subr.bf16.mxu0 %v1896
  %2228 = vmatpush2.bf16.msra.mxu0 %v1895
  %2229 = vmatprep.subr.bf16.mxu0 %v1892
  %2230 = vmatpush2.bf16.msra.mxu0 %v1891
  %2231 = vmatprep.mubr.bf16.mxu0 %v1320
  %2232 = vmatmul.mubr.bf16.gmra.mxu0 %v1319
  %v2233 = vpop.f32.mrf.mxu0
  %v2234 = vadd.f32 %v1464, %v2233
  %v2235 = vpop.f32.mrf.mxu0
  %v2236 = vadd.f32 %v1468, %v2235
  %v2237 = vpop.f32.mrf.mxu0
  %v2238 = vadd.f32 %v1464, %v2237
  %v2239 = vpop.f32.mrf.mxu0
  %v2240 = vadd.f32 %v1468, %v2239
  %2241 = vdwg.mxu0
  %2242 = vmatprep.subr.bf16.mxu0 %v1952
  %2243 = vmatpush1.bf16.msra.mxu0 %v1951
  %2244 = vmatprep.subr.bf16.mxu0 %v1948
  %2245 = vmatpush1.bf16.msra.mxu0 %v1947
  %2246 = vmatprep.subr.bf16.mxu0 %v1944
  %2247 = vmatpush1.bf16.msra.mxu0 %v1943
  %2248 = vmatprep.subr.bf16.mxu0 %v1940
  %2249 = vmatpush1.bf16.msra.mxu0 %v1939
  %2250 = vmatprep.subr.bf16.mxu0 %v1936
  %2251 = vmatpush1.bf16.msra.mxu0 %v1935
  %2252 = vmatprep.subr.bf16.mxu0 %v1932
  %2253 = vmatpush1.bf16.msra.mxu0 %v1931
  %2254 = vmatprep.subr.bf16.mxu0 %v1928
  %2255 = vmatpush1.bf16.msra.mxu0 %v1927
  %2256 = vmatprep.subr.bf16.mxu0 %v1924
  %2257 = vmatpush1.bf16.msra.mxu0 %v1923
  %2258 = vmatprep.subr.bf16.mxu0 %v1984
  %2259 = vmatpush2.bf16.msra.mxu0 %v1983
  %2260 = vmatprep.subr.bf16.mxu0 %v1980
  %2261 = vmatpush2.bf16.msra.mxu0 %v1979
  %2262 = vmatprep.subr.bf16.mxu0 %v1976
  %2263 = vmatpush2.bf16.msra.mxu0 %v1975
  %2264 = vmatprep.subr.bf16.mxu0 %v1972
  %2265 = vmatpush2.bf16.msra.mxu0 %v1971
  %2266 = vmatprep.subr.bf16.mxu0 %v1968
  %2267 = vmatpush2.bf16.msra.mxu0 %v1967
  %2268 = vmatprep.subr.bf16.mxu0 %v1964
  %2269 = vmatpush2.bf16.msra.mxu0 %v1963
  %2270 = vmatprep.subr.bf16.mxu0 %v1960
  %2271 = vmatpush2.bf16.msra.mxu0 %v1959
  %2272 = vmatprep.subr.bf16.mxu0 %v1956
  %2273 = vmatpush2.bf16.msra.mxu0 %v1955
  %2274 = vmatprep.mubr.bf16.mxu0 %v1322
  %2275 = vmatmul.mubr.bf16.gmra.mxu0 %v1321
  %v2276 = vpop.f32.mrf.mxu0
  %v2277 = vadd.f32 %v2234, %v2276
  %v2278 = vpop.f32.mrf.mxu0
  %v2279 = vadd.f32 %v2236, %v2278
  %v2280 = vpop.f32.mrf.mxu0
  %v2281 = vadd.f32 %v2238, %v2280
  %v2282 = vpop.f32.mrf.mxu0
  %v2283 = vadd.f32 %v2240, %v2282
  %2284 = vdwg.mxu0
  %v2285 = vmul.f32 %v2191, %v2191
  %v2286 = vmul.f32 %v2193, %v2193
  %v2287 = vmul.f32 %v2277, %v2277
  %v2288 = vmul.f32 %v2279, %v2279
  %v2289 = vmul.f32 %v2195, %v2195
  %v2290 = vmul.f32 %v2197, %v2197
  %v2291 = vmul.f32 %v2281, %v2281
  %v2292 = vmul.f32 %v2283, %v2283
  %v2293 = vadd.f32 %v2285, %v2286
  %v2294 = vadd.f32 %v2293, %v2287
  %v2295 = vadd.f32 %v2294, %v2288
  %2296 = vadd.xlane.f32.xlu0 %v2295
  %v2297 = vpop.xlane.xlu0 %2296
  %v2298 = vadd.f32 %v2289, %v2290
  %v2299 = vadd.f32 %v2298, %v2291
  %v2300 = vadd.f32 %v2299, %v2292
  %2301 = vadd.xlane.f32.xlu0 %v2300
  %v2302 = vpop.xlane.xlu0 %2301
  %v2303 = vmax.f32 %v2297, 1e-24
  %v2304 = vmax.f32 %v2302, 1e-24
  %v2305 = vrsqrt.pop %v2303
  %v2306 = vrsqrt.pop %v2304
  %v2307 = vmul.f32 %v2191, %v2305
  %v2308 = vmul.f32 %v2193, %v2305
  %v2309 = vmul.f32 %v2277, %v2305
  %v2310 = vmul.f32 %v2279, %v2305
  %v2311 = vmul.f32 %v2195, %v2306
  %v2312 = vmul.f32 %v2197, %v2306
  %v2313 = vmul.f32 %v2281, %v2306
  %v2314 = vmul.f32 %v2283, %v2306
  %v2315 = vpack.c.bf16 %v2311, %v2307
  %v2316 = vpack.c.bf16 %v2312, %v2308
  %v2317 = vpack.c.bf16 %v2313, %v2309
  %v2318 = vpack.c.bf16 %v2314, %v2310
  %v2323 = vunpack.c.l.b16 %v2315
  %v2324 = vunpack.c.l.b16 %v2316
  %v2325 = vunpack.c.l.b16 %v2317
  %v2326 = vunpack.c.l.b16 %v2318
  %v2327 = vunpack.c.h.b16 %v2315
  %v2328 = vunpack.c.h.b16 %v2316
  %v2329 = vunpack.c.h.b16 %v2317
  %v2330 = vunpack.c.h.b16 %v2318
  %v2331 = vpack.c.b16 %v2324, %v2323
  %v2332 = vpack.c.b16 %v2326, %v2325
  %v2333 = vpack.c.b16 %v2328, %v2327
  %v2334 = vpack.c.b16 %v2330, %v2329
  %2339 = vst [vmem:[%s10] sm:$0xff] %v2331
  %2340 = vst [vmem:[%s10 + $0x8] sm:$0xff] %v2332
  %2341 = vst [vmem:[%s10 + $0x10] sm:$0xff] %v2333
  %2342 = vst [vmem:[%s10 + $0x18] sm:$0xff] %v2334
  %2343 = vxpose.xlu0.c.b16.start [1/8] %v2315, 128
  %2344 = vxpose.xlu0.c.b16.cont [2/8] 0, 128
  %2345 = vxpose.xlu0.c.b16.cont [3/8] 0, 128
  %2346 = vxpose.xlu0.c.b16.cont [4/8] 0, 128
  %2347 = vxpose.xlu0.c.b16.cont [5/8] 0, 128
  %2348 = vxpose.xlu0.c.b16.cont [6/8] 0, 128
  %2349 = vxpose.xlu0.c.b16.cont [7/8] 0, 128
  %2350 = vxpose.xlu0.c.b16.end [8/8] 0, 128
  %v2351 = vpop.trf.xlu0
  %v2352 = vpop.trf.xlu0
  %v2353 = vpop.trf.xlu0
  %v2354 = vpop.trf.xlu0
  %v2355 = vpop.trf.xlu0
  %v2356 = vpop.trf.xlu0
  %v2357 = vpop.trf.xlu0
  %v2358 = vpop.trf.xlu0
  %2359 = vxpose.xlu0.c.b16.start [1/8] %v2316, 128
  %2360 = vxpose.xlu0.c.b16.cont [2/8] 0, 128
  %2361 = vxpose.xlu0.c.b16.cont [3/8] 0, 128
  %2362 = vxpose.xlu0.c.b16.cont [4/8] 0, 128
  %2363 = vxpose.xlu0.c.b16.cont [5/8] 0, 128
  %2364 = vxpose.xlu0.c.b16.cont [6/8] 0, 128
  %2365 = vxpose.xlu0.c.b16.cont [7/8] 0, 128
  %2366 = vxpose.xlu0.c.b16.end [8/8] 0, 128
  %v2367 = vpop.trf.xlu0
  %v2368 = vpop.trf.xlu0
  %v2369 = vpop.trf.xlu0
  %v2370 = vpop.trf.xlu0
  %v2371 = vpop.trf.xlu0
  %v2372 = vpop.trf.xlu0
  %v2373 = vpop.trf.xlu0
  %v2374 = vpop.trf.xlu0
  %2375 = vxpose.xlu0.c.b16.start [1/8] %v2317, 128
  %2376 = vxpose.xlu0.c.b16.cont [2/8] 0, 128
  %2377 = vxpose.xlu0.c.b16.cont [3/8] 0, 128
  %2378 = vxpose.xlu0.c.b16.cont [4/8] 0, 128
  %2379 = vxpose.xlu0.c.b16.cont [5/8] 0, 128
  %2380 = vxpose.xlu0.c.b16.cont [6/8] 0, 128
  %2381 = vxpose.xlu0.c.b16.cont [7/8] 0, 128
  %2382 = vxpose.xlu0.c.b16.end [8/8] 0, 128
  %v2383 = vpop.trf.xlu0
  %v2384 = vpop.trf.xlu0
  %v2385 = vpop.trf.xlu0
  %v2386 = vpop.trf.xlu0
  %v2387 = vpop.trf.xlu0
  %v2388 = vpop.trf.xlu0
  %v2389 = vpop.trf.xlu0
  %v2390 = vpop.trf.xlu0
  %2391 = vxpose.xlu0.c.b16.start [1/8] %v2318, 128
  %2392 = vxpose.xlu0.c.b16.cont [2/8] 0, 128
  %2393 = vxpose.xlu0.c.b16.cont [3/8] 0, 128
  %2394 = vxpose.xlu0.c.b16.cont [4/8] 0, 128
  %2395 = vxpose.xlu0.c.b16.cont [5/8] 0, 128
  %2396 = vxpose.xlu0.c.b16.cont [6/8] 0, 128
  %2397 = vxpose.xlu0.c.b16.cont [7/8] 0, 128
  %2398 = vxpose.xlu0.c.b16.end [8/8] 0, 128
  %v2399 = vpop.trf.xlu0
  %v2400 = vpop.trf.xlu0
  %v2401 = vpop.trf.xlu0
  %v2402 = vpop.trf.xlu0
  %v2403 = vpop.trf.xlu0
  %v2404 = vpop.trf.xlu0
  %v2405 = vpop.trf.xlu0
  %v2406 = vpop.trf.xlu0
  %v2439 = vunpack.c.l.b16 %v2351
  %v2440 = vunpack.c.h.b16 %v2351
  %v2441 = vunpack.c.l.b16 %v2352
  %v2442 = vunpack.c.h.b16 %v2352
  %v2443 = vunpack.c.l.b16 %v2353
  %v2444 = vunpack.c.h.b16 %v2353
  %v2445 = vunpack.c.l.b16 %v2354
  %v2446 = vunpack.c.h.b16 %v2354
  %v2447 = vunpack.c.l.b16 %v2355
  %v2448 = vunpack.c.h.b16 %v2355
  %v2449 = vunpack.c.l.b16 %v2356
  %v2450 = vunpack.c.h.b16 %v2356
  %v2451 = vunpack.c.l.b16 %v2357
  %v2452 = vunpack.c.h.b16 %v2357
  %v2453 = vunpack.c.l.b16 %v2358
  %v2454 = vunpack.c.h.b16 %v2358
  %v2455 = vunpack.c.l.b16 %v2367
  %v2456 = vunpack.c.h.b16 %v2367
  %v2457 = vunpack.c.l.b16 %v2368
  %v2458 = vunpack.c.h.b16 %v2368
  %v2459 = vunpack.c.l.b16 %v2369
  %v2460 = vunpack.c.h.b16 %v2369
  %v2461 = vunpack.c.l.b16 %v2370
  %v2462 = vunpack.c.h.b16 %v2370
  %v2463 = vunpack.c.l.b16 %v2371
  %v2464 = vunpack.c.h.b16 %v2371
  %v2465 = vunpack.c.l.b16 %v2372
  %v2466 = vunpack.c.h.b16 %v2372
  %v2467 = vunpack.c.l.b16 %v2373
  %v2468 = vunpack.c.h.b16 %v2373
  %v2469 = vunpack.c.l.b16 %v2374
  %v2470 = vunpack.c.h.b16 %v2374
  %v2471 = vunpack.c.l.b16 %v2383
  %v2472 = vunpack.c.h.b16 %v2383
  %v2473 = vunpack.c.l.b16 %v2384
  %v2474 = vunpack.c.h.b16 %v2384
  %v2475 = vunpack.c.l.b16 %v2385
  %v2476 = vunpack.c.h.b16 %v2385
  %v2477 = vunpack.c.l.b16 %v2386
  %v2478 = vunpack.c.h.b16 %v2386
  %v2479 = vunpack.c.l.b16 %v2387
  %v2480 = vunpack.c.h.b16 %v2387
  %v2481 = vunpack.c.l.b16 %v2388
  %v2482 = vunpack.c.h.b16 %v2388
  %v2483 = vunpack.c.l.b16 %v2389
  %v2484 = vunpack.c.h.b16 %v2389
  %v2485 = vunpack.c.l.b16 %v2390
  %v2486 = vunpack.c.h.b16 %v2390
  %v2487 = vunpack.c.l.b16 %v2399
  %v2488 = vunpack.c.h.b16 %v2399
  %v2489 = vunpack.c.l.b16 %v2400
  %v2490 = vunpack.c.h.b16 %v2400
  %v2491 = vunpack.c.l.b16 %v2401
  %v2492 = vunpack.c.h.b16 %v2401
  %v2493 = vunpack.c.l.b16 %v2402
  %v2494 = vunpack.c.h.b16 %v2402
  %v2495 = vunpack.c.l.b16 %v2403
  %v2496 = vunpack.c.h.b16 %v2403
  %v2497 = vunpack.c.l.b16 %v2404
  %v2498 = vunpack.c.h.b16 %v2404
  %v2499 = vunpack.c.l.b16 %v2405
  %v2500 = vunpack.c.h.b16 %v2405
  %v2501 = vunpack.c.l.b16 %v2406
  %v2502 = vunpack.c.h.b16 %v2406
  %v2503 = vpack.c.b16 %v2439, %v2439
  %v2504 = vpack.c.b16 %v2440, %v2440
  %v2505 = vpack.c.b16 %v2441, %v2441
  %v2506 = vpack.c.b16 %v2442, %v2442
  %v2507 = vpack.c.b16 %v2443, %v2443
  %v2508 = vpack.c.b16 %v2444, %v2444
  %v2509 = vpack.c.b16 %v2445, %v2445
  %v2510 = vpack.c.b16 %v2446, %v2446
  %v2511 = vpack.c.b16 %v2447, %v2447
  %v2512 = vpack.c.b16 %v2448, %v2448
  %v2513 = vpack.c.b16 %v2449, %v2449
  %v2514 = vpack.c.b16 %v2450, %v2450
  %v2515 = vpack.c.b16 %v2451, %v2451
  %v2516 = vpack.c.b16 %v2452, %v2452
  %v2517 = vpack.c.b16 %v2453, %v2453
  %v2518 = vpack.c.b16 %v2454, %v2454
  %v2519 = vpack.c.b16 %v2455, %v2455
  %v2520 = vpack.c.b16 %v2456, %v2456
  %v2521 = vpack.c.b16 %v2457, %v2457
  %v2522 = vpack.c.b16 %v2458, %v2458
  %v2523 = vpack.c.b16 %v2459, %v2459
  %v2524 = vpack.c.b16 %v2460, %v2460
  %v2525 = vpack.c.b16 %v2461, %v2461
  %v2526 = vpack.c.b16 %v2462, %v2462
  %v2527 = vpack.c.b16 %v2463, %v2463
  %v2528 = vpack.c.b16 %v2464, %v2464
  %v2529 = vpack.c.b16 %v2465, %v2465
  %v2530 = vpack.c.b16 %v2466, %v2466
  %v2531 = vpack.c.b16 %v2467, %v2467
  %v2532 = vpack.c.b16 %v2468, %v2468
  %v2533 = vpack.c.b16 %v2469, %v2469
  %v2534 = vpack.c.b16 %v2470, %v2470
  %v2535 = vpack.c.b16 %v2471, %v2471
  %v2536 = vpack.c.b16 %v2472, %v2472
  %v2537 = vpack.c.b16 %v2473, %v2473
  %v2538 = vpack.c.b16 %v2474, %v2474
  %v2539 = vpack.c.b16 %v2475, %v2475
  %v2540 = vpack.c.b16 %v2476, %v2476
  %v2541 = vpack.c.b16 %v2477, %v2477
  %v2542 = vpack.c.b16 %v2478, %v2478
  %v2543 = vpack.c.b16 %v2479, %v2479
  %v2544 = vpack.c.b16 %v2480, %v2480
  %v2545 = vpack.c.b16 %v2481, %v2481
  %v2546 = vpack.c.b16 %v2482, %v2482
  %v2547 = vpack.c.b16 %v2483, %v2483
  %v2548 = vpack.c.b16 %v2484, %v2484
  %v2549 = vpack.c.b16 %v2485, %v2485
  %v2550 = vpack.c.b16 %v2486, %v2486
  %v2551 = vpack.c.b16 %v2487, %v2487
  %v2552 = vpack.c.b16 %v2488, %v2488
  %v2553 = vpack.c.b16 %v2489, %v2489
  %v2554 = vpack.c.b16 %v2490, %v2490
  %v2555 = vpack.c.b16 %v2491, %v2491
  %v2556 = vpack.c.b16 %v2492, %v2492
  %v2557 = vpack.c.b16 %v2493, %v2493
  %v2558 = vpack.c.b16 %v2494, %v2494
  %v2559 = vpack.c.b16 %v2495, %v2495
  %v2560 = vpack.c.b16 %v2496, %v2496
  %v2561 = vpack.c.b16 %v2497, %v2497
  %v2562 = vpack.c.b16 %v2498, %v2498
  %v2563 = vpack.c.b16 %v2499, %v2499
  %v2564 = vpack.c.b16 %v2500, %v2500
  %v2565 = vpack.c.b16 %v2501, %v2501
  %v2566 = vpack.c.b16 %v2502, %v2502
  %vm2631 = vcmask 125952
  %2632 = vst.msk [vmem:[%s11] sm:$0xf] %vm2631, %v2503
  %2633 = vst.msk [vmem:[%s11 + $0x4] sm:$0xf] %vm2631, %v2504
  %2634 = vst.msk [vmem:[%s11 + $0x8] sm:$0xf] %vm2631, %v2505
  %2635 = vst.msk [vmem:[%s11 + $0xc] sm:$0xf] %vm2631, %v2506
  %2636 = vst.msk [vmem:[%s11 + $0x10] sm:$0xf] %vm2631, %v2507
  %2637 = vst.msk [vmem:[%s11 + $0x14] sm:$0xf] %vm2631, %v2508
  %2638 = vst.msk [vmem:[%s11 + $0x18] sm:$0xf] %vm2631, %v2509
  %2639 = vst.msk [vmem:[%s11 + $0x1c] sm:$0xf] %vm2631, %v2510
  %2640 = vst.msk [vmem:[%s11 + $0x20] sm:$0xf] %vm2631, %v2511
  %2641 = vst.msk [vmem:[%s11 + $0x24] sm:$0xf] %vm2631, %v2512
  %2642 = vst.msk [vmem:[%s11 + $0x28] sm:$0xf] %vm2631, %v2513
  %2643 = vst.msk [vmem:[%s11 + $0x2c] sm:$0xf] %vm2631, %v2514
  %2644 = vst.msk [vmem:[%s11 + $0x30] sm:$0xf] %vm2631, %v2515
  %2645 = vst.msk [vmem:[%s11 + $0x34] sm:$0xf] %vm2631, %v2516
  %2646 = vst.msk [vmem:[%s11 + $0x38] sm:$0xf] %vm2631, %v2517
  %2647 = vst.msk [vmem:[%s11 + $0x3c] sm:$0xf] %vm2631, %v2518
  %2648 = vst.msk [vmem:[%s11 + $0x40] sm:$0xf] %vm2631, %v2519
  %2649 = vst.msk [vmem:[%s11 + $0x44] sm:$0xf] %vm2631, %v2520
  %2650 = vst.msk [vmem:[%s11 + $0x48] sm:$0xf] %vm2631, %v2521
  %2651 = vst.msk [vmem:[%s11 + $0x4c] sm:$0xf] %vm2631, %v2522
  %2652 = vst.msk [vmem:[%s11 + $0x50] sm:$0xf] %vm2631, %v2523
  %2653 = vst.msk [vmem:[%s11 + $0x54] sm:$0xf] %vm2631, %v2524
  %2654 = vst.msk [vmem:[%s11 + $0x58] sm:$0xf] %vm2631, %v2525
  %2655 = vst.msk [vmem:[%s11 + $0x5c] sm:$0xf] %vm2631, %v2526
  %2656 = vst.msk [vmem:[%s11 + $0x60] sm:$0xf] %vm2631, %v2527
  %2657 = vst.msk [vmem:[%s11 + $0x64] sm:$0xf] %vm2631, %v2528
  %2658 = vst.msk [vmem:[%s11 + $0x68] sm:$0xf] %vm2631, %v2529
  %2659 = vst.msk [vmem:[%s11 + $0x6c] sm:$0xf] %vm2631, %v2530
  %2660 = vst.msk [vmem:[%s11 + $0x70] sm:$0xf] %vm2631, %v2531
  %2661 = vst.msk [vmem:[%s11 + $0x74] sm:$0xf] %vm2631, %v2532
  %2662 = vst.msk [vmem:[%s11 + $0x78] sm:$0xf] %vm2631, %v2533
  %2663 = vst.msk [vmem:[%s11 + $0x7c] sm:$0xf] %vm2631, %v2534
  %2664 = vst.msk [vmem:[%s11 + $0x80] sm:$0xf] %vm2631, %v2535
  %2665 = vst.msk [vmem:[%s11 + $0x84] sm:$0xf] %vm2631, %v2536
  %2666 = vst.msk [vmem:[%s11 + $0x88] sm:$0xf] %vm2631, %v2537
  %2667 = vst.msk [vmem:[%s11 + $0x8c] sm:$0xf] %vm2631, %v2538
  %2668 = vst.msk [vmem:[%s11 + $0x90] sm:$0xf] %vm2631, %v2539
  %2669 = vst.msk [vmem:[%s11 + $0x94] sm:$0xf] %vm2631, %v2540
  %2670 = vst.msk [vmem:[%s11 + $0x98] sm:$0xf] %vm2631, %v2541
  %2671 = vst.msk [vmem:[%s11 + $0x9c] sm:$0xf] %vm2631, %v2542
  %2672 = vst.msk [vmem:[%s11 + $0xa0] sm:$0xf] %vm2631, %v2543
  %2673 = vst.msk [vmem:[%s11 + $0xa4] sm:$0xf] %vm2631, %v2544
  %2674 = vst.msk [vmem:[%s11 + $0xa8] sm:$0xf] %vm2631, %v2545
  %2675 = vst.msk [vmem:[%s11 + $0xac] sm:$0xf] %vm2631, %v2546
  %2676 = vst.msk [vmem:[%s11 + $0xb0] sm:$0xf] %vm2631, %v2547
  %2677 = vst.msk [vmem:[%s11 + $0xb4] sm:$0xf] %vm2631, %v2548
  %2678 = vst.msk [vmem:[%s11 + $0xb8] sm:$0xf] %vm2631, %v2549
  %2679 = vst.msk [vmem:[%s11 + $0xbc] sm:$0xf] %vm2631, %v2550
  %2680 = vst.msk [vmem:[%s11 + $0xc0] sm:$0xf] %vm2631, %v2551
  %2681 = vst.msk [vmem:[%s11 + $0xc4] sm:$0xf] %vm2631, %v2552
  %2682 = vst.msk [vmem:[%s11 + $0xc8] sm:$0xf] %vm2631, %v2553
  %2683 = vst.msk [vmem:[%s11 + $0xcc] sm:$0xf] %vm2631, %v2554
  %2684 = vst.msk [vmem:[%s11 + $0xd0] sm:$0xf] %vm2631, %v2555
  %2685 = vst.msk [vmem:[%s11 + $0xd4] sm:$0xf] %vm2631, %v2556
  %2686 = vst.msk [vmem:[%s11 + $0xd8] sm:$0xf] %vm2631, %v2557
  %2687 = vst.msk [vmem:[%s11 + $0xdc] sm:$0xf] %vm2631, %v2558
  %2688 = vst.msk [vmem:[%s11 + $0xe0] sm:$0xf] %vm2631, %v2559
  %2689 = vst.msk [vmem:[%s11 + $0xe4] sm:$0xf] %vm2631, %v2560
  %2690 = vst.msk [vmem:[%s11 + $0xe8] sm:$0xf] %vm2631, %v2561
  %2691 = vst.msk [vmem:[%s11 + $0xec] sm:$0xf] %vm2631, %v2562
  %2692 = vst.msk [vmem:[%s11 + $0xf0] sm:$0xf] %vm2631, %v2563
  %2693 = vst.msk [vmem:[%s11 + $0xf4] sm:$0xf] %vm2631, %v2564
  %2694 = vst.msk [vmem:[%s11 + $0xf8] sm:$0xf] %vm2631, %v2565
  %2695 = vst.msk [vmem:[%s11 + $0xfc] sm:$0xf] %vm2631, %v2566
  %v2696 = vmul.f32 %v2307, %v2311
  %v2697 = vmul.f32 %v2308, %v2312
  %v2698 = vmul.f32 %v2309, %v2313
  %v2699 = vmul.f32 %v2310, %v2314
  %v2700 = vadd.f32 %v2696, %v2697
  %v2701 = vadd.f32 %v2700, %v2698
  %v2702 = vadd.f32 %v2701, %v2699
  %2703 = vadd.xlane.f32.xlu0 %v2702
  %v2704 = vpop.xlane.xlu0 %2703
  %vm2705 = vcmask 7168
  %2706 = vst.msk [vmem:[%s12] sm:$0xff] %vm2705, %v2704
  // Predicated region
  $region42: #{simclr_loss.2} parent=0 // pred_check
    _
  $region43: #{simclr_loss.2} parent=0 // pred_check_branch
    %2708 = sbr.rel (0) target = $region45
  $region44: #{simclr_loss.2} parent=0 // pred_region
    _
  $region45: #{simclr_loss.2} parent=0 // pred_fallthru
    _
  // Predicated region
  $region46: #{simclr_loss.2} parent=0 // pred_check
    _
  $region47: #{simclr_loss.2} parent=0 // pred_check_branch
    %2710 = sbr.rel (0) target = $region49
  $region48: #{simclr_loss.2} parent=0 // pred_region
    _
  $region49: #{simclr_loss.2} parent=0 // pred_fallthru
    _
  // Predicated region
  $region50: #{simclr_loss.2} parent=0 // pred_check
    _
  $region51: #{simclr_loss.2} parent=0 // pred_check_branch
    %2712 = sbr.rel (0) target = $region53
  $region52: #{simclr_loss.2} parent=0 // pred_region
    _
  $region53: #{simclr_loss.2} parent=0 // pred_fallthru
    _
  // Predicated region
  $region54: #{simclr_loss.2} parent=0 // pred_check
    _
  $region55: #{simclr_loss.2} parent=0 // pred_check_branch
    %2714 = sbr.rel (0) target = $region57
  $region56: #{simclr_loss.2} parent=0 // pred_region
    _
  $region57: #{simclr_loss.2} parent=0 // pred_fallthru
    _
  // Predicated region
  $region58: #{simclr_loss.2} parent=0 // pred_check
    _
  $region59: #{simclr_loss.2} parent=0 // pred_check_branch
    %2716 = sbr.rel (0) target = $region61
  $region60: #{simclr_loss.2} parent=0 // pred_region
    _
  $region61: #{simclr_loss.2} parent=0 // pred_fallthru
    _
  // Predicated region
  $region62: #{simclr_loss.2} parent=0 // pred_check
    _
  $region63: #{simclr_loss.2} parent=0 // pred_check_branch
    %2718 = sbr.rel (0) target = $region65
  $region64: #{simclr_loss.2} parent=0 // pred_region
    _
  $region65: #{simclr_loss.2} parent=0 // pred_fallthru
    _

</llo_original>
